<compile_context>
chip_gen: v7x
topology: tpu7x:2x2x1
jax: 0.10.0
libtpu: 0.0.40
codegen_flags: <defaults>
</compile_context>

<pallas_src>
import functools

import jax
import jax.numpy as jnp
from jax.experimental import pallas as pl
from jax.experimental.pallas import tpu as pltpu

_F32_INF_BITS = 0x7F800000  # bit pattern of float32 +inf


def _sum_minor2(x):
    """Sum over the (sublane, lane) minor axes, keepdims -> [..., 1, 1]."""
    return jnp.sum(jnp.sum(x, axis=-1, keepdims=True), axis=-2, keepdims=True)


def _make_kernel(neg_ind: int):
    """SSD loss kernel with neg_ind baked in; TB images per grid step."""

    def kernel(loc_p_ref, loc_t_ref, cls_p_ref, cls_t_ref, out_ref):
        tb, s, l = cls_t_ref.shape            # [TB, 8, A_pad // 8]
        n_cls = cls_p_ref.shape[1]

        cls_t = cls_t_ref[...]                # int32, padded anchors are -1
        pos = cls_t > 0
        pos_f = pos.astype(jnp.float32)
        num_pos = _sum_minor2(pos_f)          # [TB, 1, 1]

        # ---- Smooth-L1 localization loss over positive anchors --------------
        sl1 = jnp.zeros((tb, s, l), jnp.float32)
        for d in range(4):
            diff = (loc_p_ref[:, d].astype(jnp.float32)
                    - loc_t_ref[:, d].astype(jnp.float32))
            ad = jnp.abs(diff)
            sl1 = sl1 + jnp.where(ad < 1.0, 0.5 * diff * diff, ad - 0.5)
        loc_loss = _sum_minor2(sl1 * pos_f)   # [TB, 1, 1]

        # ---- Weighted cross-entropy (classes = stacked vreg planes) ---------
        t_clamped = jnp.maximum(cls_t, 0)
        m = cls_p_ref[:, 0].astype(jnp.float32)
        for c in range(1, n_cls):
            m = jnp.maximum(m, cls_p_ref[:, c].astype(jnp.float32))
        sumexp = jnp.zeros((tb, s, l), jnp.float32)
        z_t = jnp.zeros((tb, s, l), jnp.float32)
        for c in range(n_cls):
            zc = cls_p_ref[:, c].astype(jnp.float32) - m
            sumexp = sumexp + jnp.exp(zc)
            z_t = z_t + jnp.where(t_clamped == c, zc, 0.0)
        lse = jnp.log(sumexp)

        # classes_weights: ones, halved at neg_ind (static, applied per anchor).
        w_a = jnp.where(t_clamped == neg_ind, 0.5, 1.0)
        cls_loss = w_a * (lse - z_t)                      # [TB, 8, L]
        cls_loss = jnp.where(cls_t < 0, 0.0, cls_loss)    # ignored anchors -> 0

        cls_pos = _sum_minor2(cls_loss * pos_f)           # [TB, 1, 1]

        # ---- Hard-negative mining (exact, per image, vectorized over TB) ----
        # Reference sorts v = cls_loss * (pos - 1) and keeps rank < 3*num_pos.
        # All ties sit at v == 0 and add nothing to the scalar loss, so the
        # result equals sum_pos(cls_loss) + top-(3*num_pos) sum of the
        # negative-anchor losses.  The exact k-th largest value is found by a
        # 31-step bisection over the f32 bit patterns (monotone for x >= 0).
        neg_loss = jnp.where(pos, 0.0, cls_loss)          # [TB, 8, L], >= 0
        neg_bits = pltpu.bitcast(neg_loss, jnp.int32)
        k_f = 3.0 * num_pos                               # [TB, 1, 1]

        def bisect_body(_, carry):
            lo, hi = carry                                # [TB, 1, 1] int32
            mid = lo + ((hi - lo) >> 1)
            cnt = _sum_minor2((neg_bits >= mid).astype(jnp.float32))
            take = cnt >= k_f
            return (jnp.where(take, mid, lo), jnp.where(take, hi, mid))

        lo0 = jnp.zeros((tb, 1, 1), jnp.int32)
        hi0 = jnp.full((tb, 1, 1), _F32_INF_BITS, jnp.int32)
        t_bits, _ = jax.lax.fori_loop(0, 31, bisect_body, (lo0, hi0),
                                      unroll=True)

        gt_f = (neg_bits > t_bits).astype(jnp.float32)    # [TB, 8, L]
        c_gt = _sum_minor2(gt_f)                          # [TB, 1, 1]
        sum_gt = _sum_minor2(neg_loss * gt_f)             # [TB, 1, 1]
        t_val = pltpu.bitcast(t_bits, jnp.float32)        # k-th largest value
        cls_neg = sum_gt + jnp.maximum(k_f - c_gt, 0.0) * t_val
        cls_neg = jnp.where(k_f > 0.0, cls_neg, 0.0)      # [TB, 1, 1]

        # ---- lane-dense per-image partials: [loc, cls, num_pos, 0, ...] -----
        lane = jax.lax.broadcasted_iota(jnp.int32, (tb, 1, 128), 2)
        row = jnp.where(lane == 0, loc_loss,
              jnp.where(lane == 1, cls_pos + cls_neg,
              jnp.where(lane == 2, num_pos, 0.0)))
        out_ref[...] = row

    return kernel


def _pick_images_per_block(n: int, bytes_per_image: int, budget: int) -> int:
    tb = 1
    for cand in range(1, n + 1):
        if n % cand == 0 and cand * bytes_per_image <= budget:
            tb = cand
    return tb


@functools.partial(jax.jit,
                   static_argnames=("neg_ind", "num_classes", "class_major"))
def ssd_loss_neg_weights(loc_preds, loc_targets, cls_preds, cls_targets,
                         *, neg_ind: int, num_classes: int,
                         class_major: bool = False):
    """Pallas implementation of SSDLossNegWeights.forward -> scalar loss.

    If the producer can emit class-major logits ([N, num_classes, A]), pass
    class_major=True to skip the wrapper-side HBM transpose of cls_preds.
    """
    if class_major:
        n, c, a = cls_preds.shape
    else:
        n, a, c = cls_preds.shape
    assert c == num_classes
    assert loc_preds.shape == (n, a, 4) and loc_targets.shape == (n, a, 4)
    assert cls_targets.shape == (n, a)

    cls_targets = cls_targets.astype(jnp.int32)

    # "if cls_targets[i][0] == neg_ind: loc_preds[i] = loc_targets[i]"
    # Applied here so it fuses into the (small) loc relayout copy below.
    first_is_neg = (cls_targets[:, 0] == neg_ind)[:, None, None]
    loc_preds = jnp.where(first_is_neg, loc_targets, loc_preds)

    # ---- relayout: anchors dense over (8 sublanes, A_pad/8 lanes) -----------
    a_pad = ((a + 1023) // 1024) * 1024
    pad = a_pad - a
    l = a_pad // 8

    loc_p = jnp.pad(loc_preds, ((0, 0), (0, pad), (0, 0)))
    loc_t = jnp.pad(loc_targets, ((0, 0), (0, pad), (0, 0)))
    loc_p = jnp.transpose(loc_p, (0, 2, 1)).reshape(n, 4, 8, l)
    loc_t = jnp.transpose(loc_t, (0, 2, 1)).reshape(n, 4, 8, l)

    if class_major:
        cls_p = jnp.pad(cls_preds, ((0, 0), (0, 0), (0, pad))).reshape(n, c, 8, l)
    else:
        # TODO(synk): prefer class_major=True inputs; this transpose is an extra
        # HBM read+write pass over the largest tensor.
        cls_p = jnp.pad(cls_preds, ((0, 0), (0, pad), (0, 0)))
        cls_p = jnp.transpose(cls_p, (0, 2, 1)).reshape(n, c, 8, l)

    # Padded anchors get target -1 -> they contribute exactly zero everywhere.
    cls_t = jnp.pad(cls_targets, ((0, 0), (0, pad)),
                    constant_values=-1).reshape(n, 8, l)

    # ---- images per grid step from a conservative VMEM budget ---------------
    # TODO(synk): per-generation tuning (v7x: 64 MiB VMEM / 2 TCs; v5e/v6e:
    # 128 MiB) could raise this budget; kept conservative so one binary fits
    # everywhere.
    bytes_per_image = (2 * 4 * a_pad * loc_p.dtype.itemsize
                       + c * a_pad * cls_p.dtype.itemsize
                       + a_pad * 4)
    tb = _pick_images_per_block(n, bytes_per_image, budget=6 * 1024 * 1024)
    num_blocks = n // tb

    partials = pl.pallas_call(
        _make_kernel(neg_ind),
        out_shape=jax.ShapeDtypeStruct((n, 1, 128), jnp.float32),
        grid_spec=pltpu.PrefetchScalarGridSpec(
            num_scalar_prefetch=0,
            grid=(num_blocks,),
            in_specs=[
                pl.BlockSpec((tb, 4, 8, l), lambda i: (i, 0, 0, 0)),
                pl.BlockSpec((tb, 4, 8, l), lambda i: (i, 0, 0, 0)),
                pl.BlockSpec((tb, c, 8, l), lambda i: (i, 0, 0, 0)),
                pl.BlockSpec((tb, 8, l), lambda i: (i, 0, 0)),
            ],
            out_specs=pl.BlockSpec((tb, 1, 128), lambda i: (i, 0, 0)),
        ),
        compiler_params=pltpu.CompilerParams(
            dimension_semantics=("parallel",),
            vmem_limit_bytes=48 * 1024 * 1024,
        ),
    )(loc_p, loc_t, cls_p, cls_t)

    # Tiny final combine (per-image partials -> scalar loss) in the wrapper.
    loc_sum = jnp.sum(partials[:, 0, 0])
    cls_sum = jnp.sum(partials[:, 0, 1])
    n_pos = jnp.sum(partials[:, 0, 2])
    denom = jnp.where(n_pos > 0.0, n_pos, 1.0)
    # TODO(synk): the reference module's host-side print of the per-forward
    # loc/cls partials is a side effect and is omitted here.
    return (loc_sum + cls_sum) / denom


def _reference(loc_preds, loc_targets, cls_preds, cls_targets, neg_ind, num_classes):
    """Pure-JAX reference mirroring the PyTorch forward semantics."""
    weights = jnp.ones((num_classes,), jnp.float32).at[neg_ind].set(0.5)
    pos = cls_targets > 0
    first_is_neg = (cls_targets[:, 0:1] == neg_ind)
    loc_preds = jnp.where(first_is_neg[:, :, None], loc_targets, loc_preds)
    num_pos = jnp.sum(pos)

    diff = loc_preds - loc_targets
    ad = jnp.abs(diff)
    sl1 = jnp.where(ad < 1.0, 0.5 * diff * diff, ad - 0.5)
    loc_loss = jnp.sum(sl1 * pos[:, :, None].astype(jnp.float32))

    logp = jax.nn.log_softmax(cls_preds, axis=-1)
    t = jnp.maximum(cls_targets, 0)
    nll = -jnp.take_along_axis(logp, t[:, :, None], axis=-1)[:, :, 0]
    cls_loss = nll * weights[t]
    cls_loss = jnp.where(cls_targets < 0, 0.0, cls_loss)

    v = cls_loss * (pos.astype(jnp.float32) - 1.0)
    idx = jnp.argsort(v, axis=1)
    rank = jnp.argsort(idx, axis=1)
    num_neg = 3 * jnp.sum(pos.astype(jnp.int32), axis=1, keepdims=True)
    neg = rank < num_neg
    cls_loss_total = jnp.sum(jnp.where(pos | neg, cls_loss, 0.0))

    denom = jnp.where(num_pos > 0, num_pos.astype(jnp.float32), 1.0)
    return (loc_loss + cls_loss_total) / denom


if __name__ == "__main__":
    N, A, C = 2, 64, 8       # batch, #anchors, #classes
    NEG_IND = 0

    key = jax.random.PRNGKey(0)
    k1, k2, k3, k4 = jax.random.split(key, 4)
    loc_preds = jax.random.normal(k1, (N, A, 4), jnp.float32)
    loc_targets = jax.random.normal(k2, (N, A, 4), jnp.float32)
    cls_preds = jax.random.normal(k3, (N, A, C), jnp.float32)
    # targets in {-1, 0, 1, ..., C-1}: -1 = ignored, 0 = background (neg_ind)
    cls_targets = jax.random.randint(k4, (N, A), -1, C, jnp.int32)
    # exercise the "first target == neg_ind" branch for sample 0
    cls_targets = cls_targets.at[0, 0].set(NEG_IND)

    loss = ssd_loss_neg_weights(loc_preds, loc_targets, cls_preds, cls_targets,
                                neg_ind=NEG_IND, num_classes=C)
    loss = jax.block_until_ready(loss)

    ref = _reference(loc_preds, loc_targets, cls_preds, cls_targets, NEG_IND, C)
    assert jnp.allclose(loss, ref, rtol=1e-5, atol=1e-5), (loss, ref)
    print("KERNEL_OK")
</pallas_src>

<mosaic_0001>
module attributes {stable_mosaic.version = 11 : i64} {
  func.func @kernel(%arg0: i32, %arg1: memref<2x4x8x128xf32, #tpu.memory_space<vmem>>, %arg2: memref<2x4x8x128xf32, #tpu.memory_space<vmem>>, %arg3: memref<2x8x8x128xf32, #tpu.memory_space<vmem>>, %arg4: memref<2x8x128xi32, #tpu.memory_space<vmem>>, %arg5: memref<2x1x128xf32, #tpu.memory_space<vmem>>) attributes {dimension_semantics = [#tpu.dimension_semantics<parallel>], iteration_bounds = array<i64: 1>, scalar_prefetch = 0 : i64, scratch_operands = 0 : i64, tpu.core_type = #tpu.core_type<tc>, window_params = [{transform_indices = @transform_0, window_bounds = array<i64: 2, 4, 8, 128>}, {transform_indices = @transform_1, window_bounds = array<i64: 2, 4, 8, 128>}, {transform_indices = @transform_2, window_bounds = array<i64: 2, 8, 8, 128>}, {transform_indices = @transform_3, window_bounds = array<i64: 2, 8, 128>}, {transform_indices = @transform_4, window_bounds = array<i64: 2, 1, 128>}]} {
    %c0 = arith.constant 0 : index
    %c0_0 = arith.constant 0 : index
    %c0_1 = arith.constant 0 : index
    %0 = vector.load %arg4[%c0, %c0_0, %c0_1] : memref<2x8x128xi32, #tpu.memory_space<vmem>>, vector<2x8x128xi32>
    %c0_i32 = arith.constant 0 : i32
    %1 = vector.broadcast %c0_i32 : i32 to vector<2x8x128xi32>
    %2 = arith.cmpi sgt, %0, %1 : vector<2x8x128xi32>
    %3 = arith.extui %2 : vector<2x8x128xi1> to vector<2x8x128xi32>
    %4 = arith.sitofp %3 : vector<2x8x128xi32> to vector<2x8x128xf32>
    %cst = arith.constant dense<0.000000e+00> : vector<2x8xf32>
    %5 = vector.multi_reduction <add>, %4, %cst [2] : vector<2x8x128xf32> to vector<2x8xf32>
    %6 = vector.shape_cast %5 : vector<2x8xf32> to vector<2x8x1xf32>
    %cst_2 = arith.constant dense<0.000000e+00> : vector<2x1xf32>
    %7 = vector.multi_reduction <add>, %6, %cst_2 [1] : vector<2x8x1xf32> to vector<2x1xf32>
    %8 = vector.shape_cast %7 : vector<2x1xf32> to vector<2x1x1xf32>
    %cst_3 = arith.constant 0.000000e+00 : f32
    %9 = vector.broadcast %cst_3 : f32 to vector<2x8x128xf32>
    %c0_4 = arith.constant 0 : index
    %c0_5 = arith.constant 0 : index
    %c0_6 = arith.constant 0 : index
    %c0_7 = arith.constant 0 : index
    %10 = vector.load %arg1[%c0_4, %c0_5, %c0_6, %c0_7] : memref<2x4x8x128xf32, #tpu.memory_space<vmem>>, vector<2x1x8x128xf32>
    %11 = vector.shape_cast %10 : vector<2x1x8x128xf32> to vector<2x8x128xf32>
    %c0_8 = arith.constant 0 : index
    %c0_9 = arith.constant 0 : index
    %c0_10 = arith.constant 0 : index
    %c0_11 = arith.constant 0 : index
    %12 = vector.load %arg2[%c0_8, %c0_9, %c0_10, %c0_11] : memref<2x4x8x128xf32, #tpu.memory_space<vmem>>, vector<2x1x8x128xf32>
    %13 = vector.shape_cast %12 : vector<2x1x8x128xf32> to vector<2x8x128xf32>
    %14 = arith.subf %11, %13 : vector<2x8x128xf32>
    %15 = math.absf %14 : vector<2x8x128xf32>
    %cst_12 = arith.constant 1.000000e+00 : f32
    %16 = vector.broadcast %cst_12 : f32 to vector<2x8x128xf32>
    %17 = arith.cmpf olt, %15, %16 : vector<2x8x128xf32>
    %cst_13 = arith.constant 5.000000e-01 : f32
    %18 = vector.broadcast %cst_13 : f32 to vector<2x8x128xf32>
    %19 = arith.mulf %18, %14 : vector<2x8x128xf32>
    %20 = arith.mulf %19, %14 : vector<2x8x128xf32>
    %cst_14 = arith.constant 5.000000e-01 : f32
    %21 = vector.broadcast %cst_14 : f32 to vector<2x8x128xf32>
    %22 = arith.subf %15, %21 : vector<2x8x128xf32>
    %23 = arith.select %17, %20, %22 : vector<2x8x128xi1>, vector<2x8x128xf32>
    %24 = arith.addf %9, %23 : vector<2x8x128xf32>
    %c0_15 = arith.constant 0 : index
    %c1 = arith.constant 1 : index
    %c0_16 = arith.constant 0 : index
    %c0_17 = arith.constant 0 : index
    %25 = vector.load %arg1[%c0_15, %c1, %c0_16, %c0_17] : memref<2x4x8x128xf32, #tpu.memory_space<vmem>>, vector<2x1x8x128xf32>
    %26 = vector.shape_cast %25 : vector<2x1x8x128xf32> to vector<2x8x128xf32>
    %c0_18 = arith.constant 0 : index
    %c1_19 = arith.constant 1 : index
    %c0_20 = arith.constant 0 : index
    %c0_21 = arith.constant 0 : index
    %27 = vector.load %arg2[%c0_18, %c1_19, %c0_20, %c0_21] : memref<2x4x8x128xf32, #tpu.memory_space<vmem>>, vector<2x1x8x128xf32>
    %28 = vector.shape_cast %27 : vector<2x1x8x128xf32> to vector<2x8x128xf32>
    %29 = arith.subf %26, %28 : vector<2x8x128xf32>
    %30 = math.absf %29 : vector<2x8x128xf32>
    %cst_22 = arith.constant 1.000000e+00 : f32
    %31 = vector.broadcast %cst_22 : f32 to vector<2x8x128xf32>
    %32 = arith.cmpf olt, %30, %31 : vector<2x8x128xf32>
    %cst_23 = arith.constant 5.000000e-01 : f32
    %33 = vector.broadcast %cst_23 : f32 to vector<2x8x128xf32>
    %34 = arith.mulf %33, %29 : vector<2x8x128xf32>
    %35 = arith.mulf %34, %29 : vector<2x8x128xf32>
    %cst_24 = arith.constant 5.000000e-01 : f32
    %36 = vector.broadcast %cst_24 : f32 to vector<2x8x128xf32>
    %37 = arith.subf %30, %36 : vector<2x8x128xf32>
    %38 = arith.select %32, %35, %37 : vector<2x8x128xi1>, vector<2x8x128xf32>
    %39 = arith.addf %24, %38 : vector<2x8x128xf32>
    %c0_25 = arith.constant 0 : index
    %c2 = arith.constant 2 : index
    %c0_26 = arith.constant 0 : index
    %c0_27 = arith.constant 0 : index
    %40 = vector.load %arg1[%c0_25, %c2, %c0_26, %c0_27] : memref<2x4x8x128xf32, #tpu.memory_space<vmem>>, vector<2x1x8x128xf32>
    %41 = vector.shape_cast %40 : vector<2x1x8x128xf32> to vector<2x8x128xf32>
    %c0_28 = arith.constant 0 : index
    %c2_29 = arith.constant 2 : index
    %c0_30 = arith.constant 0 : index
    %c0_31 = arith.constant 0 : index
    %42 = vector.load %arg2[%c0_28, %c2_29, %c0_30, %c0_31] : memref<2x4x8x128xf32, #tpu.memory_space<vmem>>, vector<2x1x8x128xf32>
    %43 = vector.shape_cast %42 : vector<2x1x8x128xf32> to vector<2x8x128xf32>
    %44 = arith.subf %41, %43 : vector<2x8x128xf32>
    %45 = math.absf %44 : vector<2x8x128xf32>
    %cst_32 = arith.constant 1.000000e+00 : f32
    %46 = vector.broadcast %cst_32 : f32 to vector<2x8x128xf32>
    %47 = arith.cmpf olt, %45, %46 : vector<2x8x128xf32>
    %cst_33 = arith.constant 5.000000e-01 : f32
    %48 = vector.broadcast %cst_33 : f32 to vector<2x8x128xf32>
    %49 = arith.mulf %48, %44 : vector<2x8x128xf32>
    %50 = arith.mulf %49, %44 : vector<2x8x128xf32>
    %cst_34 = arith.constant 5.000000e-01 : f32
    %51 = vector.broadcast %cst_34 : f32 to vector<2x8x128xf32>
    %52 = arith.subf %45, %51 : vector<2x8x128xf32>
    %53 = arith.select %47, %50, %52 : vector<2x8x128xi1>, vector<2x8x128xf32>
    %54 = arith.addf %39, %53 : vector<2x8x128xf32>
    %c0_35 = arith.constant 0 : index
    %c3 = arith.constant 3 : index
    %c0_36 = arith.constant 0 : index
    %c0_37 = arith.constant 0 : index
    %55 = vector.load %arg1[%c0_35, %c3, %c0_36, %c0_37] : memref<2x4x8x128xf32, #tpu.memory_space<vmem>>, vector<2x1x8x128xf32>
    %56 = vector.shape_cast %55 : vector<2x1x8x128xf32> to vector<2x8x128xf32>
    %c0_38 = arith.constant 0 : index
    %c3_39 = arith.constant 3 : index
    %c0_40 = arith.constant 0 : index
    %c0_41 = arith.constant 0 : index
    %57 = vector.load %arg2[%c0_38, %c3_39, %c0_40, %c0_41] : memref<2x4x8x128xf32, #tpu.memory_space<vmem>>, vector<2x1x8x128xf32>
    %58 = vector.shape_cast %57 : vector<2x1x8x128xf32> to vector<2x8x128xf32>
    %59 = arith.subf %56, %58 : vector<2x8x128xf32>
    %60 = math.absf %59 : vector<2x8x128xf32>
    %cst_42 = arith.constant 1.000000e+00 : f32
    %61 = vector.broadcast %cst_42 : f32 to vector<2x8x128xf32>
    %62 = arith.cmpf olt, %60, %61 : vector<2x8x128xf32>
    %cst_43 = arith.constant 5.000000e-01 : f32
    %63 = vector.broadcast %cst_43 : f32 to vector<2x8x128xf32>
    %64 = arith.mulf %63, %59 : vector<2x8x128xf32>
    %65 = arith.mulf %64, %59 : vector<2x8x128xf32>
    %cst_44 = arith.constant 5.000000e-01 : f32
    %66 = vector.broadcast %cst_44 : f32 to vector<2x8x128xf32>
    %67 = arith.subf %60, %66 : vector<2x8x128xf32>
    %68 = arith.select %62, %65, %67 : vector<2x8x128xi1>, vector<2x8x128xf32>
    %69 = arith.addf %54, %68 : vector<2x8x128xf32>
    %70 = arith.mulf %69, %4 : vector<2x8x128xf32>
    %cst_45 = arith.constant dense<0.000000e+00> : vector<2x8xf32>
    %71 = vector.multi_reduction <add>, %70, %cst_45 [2] : vector<2x8x128xf32> to vector<2x8xf32>
    %72 = vector.shape_cast %71 : vector<2x8xf32> to vector<2x8x1xf32>
    %cst_46 = arith.constant dense<0.000000e+00> : vector<2x1xf32>
    %73 = vector.multi_reduction <add>, %72, %cst_46 [1] : vector<2x8x1xf32> to vector<2x1xf32>
    %74 = vector.shape_cast %73 : vector<2x1xf32> to vector<2x1x1xf32>
    %c0_i32_47 = arith.constant 0 : i32
    %75 = vector.broadcast %c0_i32_47 : i32 to vector<2x8x128xi32>
    %76 = arith.maxsi %0, %75 : vector<2x8x128xi32>
    %c0_48 = arith.constant 0 : index
    %c0_49 = arith.constant 0 : index
    %c0_50 = arith.constant 0 : index
    %c0_51 = arith.constant 0 : index
    %77 = vector.load %arg3[%c0_48, %c0_49, %c0_50, %c0_51] : memref<2x8x8x128xf32, #tpu.memory_space<vmem>>, vector<2x1x8x128xf32>
    %78 = vector.shape_cast %77 : vector<2x1x8x128xf32> to vector<2x8x128xf32>
    %c0_52 = arith.constant 0 : index
    %c1_53 = arith.constant 1 : index
    %c0_54 = arith.constant 0 : index
    %c0_55 = arith.constant 0 : index
    %79 = vector.load %arg3[%c0_52, %c1_53, %c0_54, %c0_55] : memref<2x8x8x128xf32, #tpu.memory_space<vmem>>, vector<2x1x8x128xf32>
    %80 = vector.shape_cast %79 : vector<2x1x8x128xf32> to vector<2x8x128xf32>
    %81 = arith.maximumf %78, %80 : vector<2x8x128xf32>
    %c0_56 = arith.constant 0 : index
    %c2_57 = arith.constant 2 : index
    %c0_58 = arith.constant 0 : index
    %c0_59 = arith.constant 0 : index
    %82 = vector.load %arg3[%c0_56, %c2_57, %c0_58, %c0_59] : memref<2x8x8x128xf32, #tpu.memory_space<vmem>>, vector<2x1x8x128xf32>
    %83 = vector.shape_cast %82 : vector<2x1x8x128xf32> to vector<2x8x128xf32>
    %84 = arith.maximumf %81, %83 : vector<2x8x128xf32>
    %c0_60 = arith.constant 0 : index
    %c3_61 = arith.constant 3 : index
    %c0_62 = arith.constant 0 : index
    %c0_63 = arith.constant 0 : index
    %85 = vector.load %arg3[%c0_60, %c3_61, %c0_62, %c0_63] : memref<2x8x8x128xf32, #tpu.memory_space<vmem>>, vector<2x1x8x128xf32>
    %86 = vector.shape_cast %85 : vector<2x1x8x128xf32> to vector<2x8x128xf32>
    %87 = arith.maximumf %84, %86 : vector<2x8x128xf32>
    %c0_64 = arith.constant 0 : index
    %c4 = arith.constant 4 : index
    %c0_65 = arith.constant 0 : index
    %c0_66 = arith.constant 0 : index
    %88 = vector.load %arg3[%c0_64, %c4, %c0_65, %c0_66] : memref<2x8x8x128xf32, #tpu.memory_space<vmem>>, vector<2x1x8x128xf32>
    %89 = vector.shape_cast %88 : vector<2x1x8x128xf32> to vector<2x8x128xf32>
    %90 = arith.maximumf %87, %89 : vector<2x8x128xf32>
    %c0_67 = arith.constant 0 : index
    %c5 = arith.constant 5 : index
    %c0_68 = arith.constant 0 : index
    %c0_69 = arith.constant 0 : index
    %91 = vector.load %arg3[%c0_67, %c5, %c0_68, %c0_69] : memref<2x8x8x128xf32, #tpu.memory_space<vmem>>, vector<2x1x8x128xf32>
    %92 = vector.shape_cast %91 : vector<2x1x8x128xf32> to vector<2x8x128xf32>
    %93 = arith.maximumf %90, %92 : vector<2x8x128xf32>
    %c0_70 = arith.constant 0 : index
    %c6 = arith.constant 6 : index
    %c0_71 = arith.constant 0 : index
    %c0_72 = arith.constant 0 : index
    %94 = vector.load %arg3[%c0_70, %c6, %c0_71, %c0_72] : memref<2x8x8x128xf32, #tpu.memory_space<vmem>>, vector<2x1x8x128xf32>
    %95 = vector.shape_cast %94 : vector<2x1x8x128xf32> to vector<2x8x128xf32>
    %96 = arith.maximumf %93, %95 : vector<2x8x128xf32>
    %c0_73 = arith.constant 0 : index
    %c7 = arith.constant 7 : index
    %c0_74 = arith.constant 0 : index
    %c0_75 = arith.constant 0 : index
    %97 = vector.load %arg3[%c0_73, %c7, %c0_74, %c0_75] : memref<2x8x8x128xf32, #tpu.memory_space<vmem>>, vector<2x1x8x128xf32>
    %98 = vector.shape_cast %97 : vector<2x1x8x128xf32> to vector<2x8x128xf32>
    %99 = arith.maximumf %96, %98 : vector<2x8x128xf32>
    %cst_76 = arith.constant 0.000000e+00 : f32
    %100 = vector.broadcast %cst_76 : f32 to vector<2x8x128xf32>
    %cst_77 = arith.constant 0.000000e+00 : f32
    %101 = vector.broadcast %cst_77 : f32 to vector<2x8x128xf32>
    %c0_78 = arith.constant 0 : index
    %c0_79 = arith.constant 0 : index
    %c0_80 = arith.constant 0 : index
    %c0_81 = arith.constant 0 : index
    %102 = vector.load %arg3[%c0_78, %c0_79, %c0_80, %c0_81] : memref<2x8x8x128xf32, #tpu.memory_space<vmem>>, vector<2x1x8x128xf32>
    %103 = vector.shape_cast %102 : vector<2x1x8x128xf32> to vector<2x8x128xf32>
    %104 = arith.subf %103, %99 : vector<2x8x128xf32>
    %105 = math.exp %104 : vector<2x8x128xf32>
    %106 = arith.addf %100, %105 : vector<2x8x128xf32>
    %c0_i32_82 = arith.constant 0 : i32
    %107 = vector.broadcast %c0_i32_82 : i32 to vector<2x8x128xi32>
    %108 = arith.cmpi eq, %76, %107 : vector<2x8x128xi32>
    %cst_83 = arith.constant 0.000000e+00 : f32
    %109 = vector.broadcast %cst_83 : f32 to vector<2x8x128xf32>
    %110 = arith.select %108, %104, %109 : vector<2x8x128xi1>, vector<2x8x128xf32>
    %111 = arith.addf %101, %110 : vector<2x8x128xf32>
    %c0_84 = arith.constant 0 : index
    %c1_85 = arith.constant 1 : index
    %c0_86 = arith.constant 0 : index
    %c0_87 = arith.constant 0 : index
    %112 = vector.load %arg3[%c0_84, %c1_85, %c0_86, %c0_87] : memref<2x8x8x128xf32, #tpu.memory_space<vmem>>, vector<2x1x8x128xf32>
    %113 = vector.shape_cast %112 : vector<2x1x8x128xf32> to vector<2x8x128xf32>
    %114 = arith.subf %113, %99 : vector<2x8x128xf32>
    %115 = math.exp %114 : vector<2x8x128xf32>
    %116 = arith.addf %106, %115 : vector<2x8x128xf32>
    %c1_i32 = arith.constant 1 : i32
    %117 = vector.broadcast %c1_i32 : i32 to vector<2x8x128xi32>
    %118 = arith.cmpi eq, %76, %117 : vector<2x8x128xi32>
    %cst_88 = arith.constant 0.000000e+00 : f32
    %119 = vector.broadcast %cst_88 : f32 to vector<2x8x128xf32>
    %120 = arith.select %118, %114, %119 : vector<2x8x128xi1>, vector<2x8x128xf32>
    %121 = arith.addf %111, %120 : vector<2x8x128xf32>
    %c0_89 = arith.constant 0 : index
    %c2_90 = arith.constant 2 : index
    %c0_91 = arith.constant 0 : index
    %c0_92 = arith.constant 0 : index
    %122 = vector.load %arg3[%c0_89, %c2_90, %c0_91, %c0_92] : memref<2x8x8x128xf32, #tpu.memory_space<vmem>>, vector<2x1x8x128xf32>
    %123 = vector.shape_cast %122 : vector<2x1x8x128xf32> to vector<2x8x128xf32>
    %124 = arith.subf %123, %99 : vector<2x8x128xf32>
    %125 = math.exp %124 : vector<2x8x128xf32>
    %126 = arith.addf %116, %125 : vector<2x8x128xf32>
    %c2_i32 = arith.constant 2 : i32
    %127 = vector.broadcast %c2_i32 : i32 to vector<2x8x128xi32>
    %128 = arith.cmpi eq, %76, %127 : vector<2x8x128xi32>
    %cst_93 = arith.constant 0.000000e+00 : f32
    %129 = vector.broadcast %cst_93 : f32 to vector<2x8x128xf32>
    %130 = arith.select %128, %124, %129 : vector<2x8x128xi1>, vector<2x8x128xf32>
    %131 = arith.addf %121, %130 : vector<2x8x128xf32>
    %c0_94 = arith.constant 0 : index
    %c3_95 = arith.constant 3 : index
    %c0_96 = arith.constant 0 : index
    %c0_97 = arith.constant 0 : index
    %132 = vector.load %arg3[%c0_94, %c3_95, %c0_96, %c0_97] : memref<2x8x8x128xf32, #tpu.memory_space<vmem>>, vector<2x1x8x128xf32>
    %133 = vector.shape_cast %132 : vector<2x1x8x128xf32> to vector<2x8x128xf32>
    %134 = arith.subf %133, %99 : vector<2x8x128xf32>
    %135 = math.exp %134 : vector<2x8x128xf32>
    %136 = arith.addf %126, %135 : vector<2x8x128xf32>
    %c3_i32 = arith.constant 3 : i32
    %137 = vector.broadcast %c3_i32 : i32 to vector<2x8x128xi32>
    %138 = arith.cmpi eq, %76, %137 : vector<2x8x128xi32>
    %cst_98 = arith.constant 0.000000e+00 : f32
    %139 = vector.broadcast %cst_98 : f32 to vector<2x8x128xf32>
    %140 = arith.select %138, %134, %139 : vector<2x8x128xi1>, vector<2x8x128xf32>
    %141 = arith.addf %131, %140 : vector<2x8x128xf32>
    %c0_99 = arith.constant 0 : index
    %c4_100 = arith.constant 4 : index
    %c0_101 = arith.constant 0 : index
    %c0_102 = arith.constant 0 : index
    %142 = vector.load %arg3[%c0_99, %c4_100, %c0_101, %c0_102] : memref<2x8x8x128xf32, #tpu.memory_space<vmem>>, vector<2x1x8x128xf32>
    %143 = vector.shape_cast %142 : vector<2x1x8x128xf32> to vector<2x8x128xf32>
    %144 = arith.subf %143, %99 : vector<2x8x128xf32>
    %145 = math.exp %144 : vector<2x8x128xf32>
    %146 = arith.addf %136, %145 : vector<2x8x128xf32>
    %c4_i32 = arith.constant 4 : i32
    %147 = vector.broadcast %c4_i32 : i32 to vector<2x8x128xi32>
    %148 = arith.cmpi eq, %76, %147 : vector<2x8x128xi32>
    %cst_103 = arith.constant 0.000000e+00 : f32
    %149 = vector.broadcast %cst_103 : f32 to vector<2x8x128xf32>
    %150 = arith.select %148, %144, %149 : vector<2x8x128xi1>, vector<2x8x128xf32>
    %151 = arith.addf %141, %150 : vector<2x8x128xf32>
    %c0_104 = arith.constant 0 : index
    %c5_105 = arith.constant 5 : index
    %c0_106 = arith.constant 0 : index
    %c0_107 = arith.constant 0 : index
    %152 = vector.load %arg3[%c0_104, %c5_105, %c0_106, %c0_107] : memref<2x8x8x128xf32, #tpu.memory_space<vmem>>, vector<2x1x8x128xf32>
    %153 = vector.shape_cast %152 : vector<2x1x8x128xf32> to vector<2x8x128xf32>
    %154 = arith.subf %153, %99 : vector<2x8x128xf32>
    %155 = math.exp %154 : vector<2x8x128xf32>
    %156 = arith.addf %146, %155 : vector<2x8x128xf32>
    %c5_i32 = arith.constant 5 : i32
    %157 = vector.broadcast %c5_i32 : i32 to vector<2x8x128xi32>
    %158 = arith.cmpi eq, %76, %157 : vector<2x8x128xi32>
    %cst_108 = arith.constant 0.000000e+00 : f32
    %159 = vector.broadcast %cst_108 : f32 to vector<2x8x128xf32>
    %160 = arith.select %158, %154, %159 : vector<2x8x128xi1>, vector<2x8x128xf32>
    %161 = arith.addf %151, %160 : vector<2x8x128xf32>
    %c0_109 = arith.constant 0 : index
    %c6_110 = arith.constant 6 : index
    %c0_111 = arith.constant 0 : index
    %c0_112 = arith.constant 0 : index
    %162 = vector.load %arg3[%c0_109, %c6_110, %c0_111, %c0_112] : memref<2x8x8x128xf32, #tpu.memory_space<vmem>>, vector<2x1x8x128xf32>
    %163 = vector.shape_cast %162 : vector<2x1x8x128xf32> to vector<2x8x128xf32>
    %164 = arith.subf %163, %99 : vector<2x8x128xf32>
    %165 = math.exp %164 : vector<2x8x128xf32>
    %166 = arith.addf %156, %165 : vector<2x8x128xf32>
    %c6_i32 = arith.constant 6 : i32
    %167 = vector.broadcast %c6_i32 : i32 to vector<2x8x128xi32>
    %168 = arith.cmpi eq, %76, %167 : vector<2x8x128xi32>
    %cst_113 = arith.constant 0.000000e+00 : f32
    %169 = vector.broadcast %cst_113 : f32 to vector<2x8x128xf32>
    %170 = arith.select %168, %164, %169 : vector<2x8x128xi1>, vector<2x8x128xf32>
    %171 = arith.addf %161, %170 : vector<2x8x128xf32>
    %c0_114 = arith.constant 0 : index
    %c7_115 = arith.constant 7 : index
    %c0_116 = arith.constant 0 : index
    %c0_117 = arith.constant 0 : index
    %172 = vector.load %arg3[%c0_114, %c7_115, %c0_116, %c0_117] : memref<2x8x8x128xf32, #tpu.memory_space<vmem>>, vector<2x1x8x128xf32>
    %173 = vector.shape_cast %172 : vector<2x1x8x128xf32> to vector<2x8x128xf32>
    %174 = arith.subf %173, %99 : vector<2x8x128xf32>
    %175 = math.exp %174 : vector<2x8x128xf32>
    %176 = arith.addf %166, %175 : vector<2x8x128xf32>
    %c7_i32 = arith.constant 7 : i32
    %177 = vector.broadcast %c7_i32 : i32 to vector<2x8x128xi32>
    %178 = arith.cmpi eq, %76, %177 : vector<2x8x128xi32>
    %cst_118 = arith.constant 0.000000e+00 : f32
    %179 = vector.broadcast %cst_118 : f32 to vector<2x8x128xf32>
    %180 = arith.select %178, %174, %179 : vector<2x8x128xi1>, vector<2x8x128xf32>
    %181 = arith.addf %171, %180 : vector<2x8x128xf32>
    %182 = math.log %176 : vector<2x8x128xf32>
    %c0_i32_119 = arith.constant 0 : i32
    %183 = vector.broadcast %c0_i32_119 : i32 to vector<2x8x128xi32>
    %184 = arith.cmpi eq, %76, %183 : vector<2x8x128xi32>
    %cst_120 = arith.constant 5.000000e-01 : f32
    %cst_121 = arith.constant 1.000000e+00 : f32
    %185 = vector.broadcast %cst_120 : f32 to vector<2x8x128xf32>
    %186 = vector.broadcast %cst_121 : f32 to vector<2x8x128xf32>
    %187 = arith.select %184, %185, %186 : vector<2x8x128xi1>, vector<2x8x128xf32>
    %188 = arith.subf %182, %181 : vector<2x8x128xf32>
    %189 = arith.mulf %187, %188 : vector<2x8x128xf32>
    %c0_i32_122 = arith.constant 0 : i32
    %190 = vector.broadcast %c0_i32_122 : i32 to vector<2x8x128xi32>
    %191 = arith.cmpi slt, %0, %190 : vector<2x8x128xi32>
    %cst_123 = arith.constant 0.000000e+00 : f32
    %192 = vector.broadcast %cst_123 : f32 to vector<2x8x128xf32>
    %193 = arith.select %191, %192, %189 : vector<2x8x128xi1>, vector<2x8x128xf32>
    %194 = arith.mulf %193, %4 : vector<2x8x128xf32>
    %cst_124 = arith.constant dense<0.000000e+00> : vector<2x8xf32>
    %195 = vector.multi_reduction <add>, %194, %cst_124 [2] : vector<2x8x128xf32> to vector<2x8xf32>
    %196 = vector.shape_cast %195 : vector<2x8xf32> to vector<2x8x1xf32>
    %cst_125 = arith.constant dense<0.000000e+00> : vector<2x1xf32>
    %197 = vector.multi_reduction <add>, %196, %cst_125 [1] : vector<2x8x1xf32> to vector<2x1xf32>
    %198 = vector.shape_cast %197 : vector<2x1xf32> to vector<2x1x1xf32>
    %cst_126 = arith.constant 0.000000e+00 : f32
    %199 = vector.broadcast %cst_126 : f32 to vector<2x8x128xf32>
    %200 = arith.select %2, %199, %193 : vector<2x8x128xi1>, vector<2x8x128xf32>
    %201 = tpu.bitcast %200 : vector<2x8x128xf32> -> vector<2x8x128xi32>
    %cst_127 = arith.constant 3.000000e+00 : f32
    %202 = vector.broadcast %cst_127 : f32 to vector<2x1x1xf32>
    %203 = arith.mulf %202, %8 : vector<2x1x1xf32>
    %c0_i32_128 = arith.constant 0 : i32
    %204 = vector.broadcast %c0_i32_128 : i32 to vector<2x1x1xi32>
    %c2139095040_i32 = arith.constant 2139095040 : i32
    %205 = vector.broadcast %c2139095040_i32 : i32 to vector<2x1x1xi32>
    %c0_i32_129 = arith.constant 0 : i32
    %206 = arith.subi %205, %204 : vector<2x1x1xi32>
    %c1_i32_130 = arith.constant 1 : i32
    %207 = vector.broadcast %c1_i32_130 : i32 to vector<2x1x1xi32>
    %208 = arith.shrsi %206, %207 : vector<2x1x1xi32>
    %209 = arith.addi %204, %208 : vector<2x1x1xi32>
    %210 = vector.broadcast %209 : vector<2x1x1xi32> to vector<2x8x128xi32>
    %211 = arith.cmpi sge, %201, %210 : vector<2x8x128xi32>
    %212 = arith.extui %211 : vector<2x8x128xi1> to vector<2x8x128xi32>
    %213 = arith.sitofp %212 : vector<2x8x128xi32> to vector<2x8x128xf32>
    %cst_131 = arith.constant dense<0.000000e+00> : vector<2x8xf32>
    %214 = vector.multi_reduction <add>, %213, %cst_131 [2] : vector<2x8x128xf32> to vector<2x8xf32>
    %215 = vector.shape_cast %214 : vector<2x8xf32> to vector<2x8x1xf32>
    %cst_132 = arith.constant dense<0.000000e+00> : vector<2x1xf32>
    %216 = vector.multi_reduction <add>, %215, %cst_132 [1] : vector<2x8x1xf32> to vector<2x1xf32>
    %217 = vector.shape_cast %216 : vector<2x1xf32> to vector<2x1x1xf32>
    %218 = arith.cmpf oge, %217, %203 : vector<2x1x1xf32>
    %219 = arith.select %218, %209, %204 : vector<2x1x1xi1>, vector<2x1x1xi32>
    %220 = arith.select %218, %205, %209 : vector<2x1x1xi1>, vector<2x1x1xi32>
    %c1_i32_133 = arith.constant 1 : i32
    %221 = arith.subi %220, %219 : vector<2x1x1xi32>
    %c1_i32_134 = arith.constant 1 : i32
    %222 = vector.broadcast %c1_i32_134 : i32 to vector<2x1x1xi32>
    %223 = arith.shrsi %221, %222 : vector<2x1x1xi32>
    %224 = arith.addi %219, %223 : vector<2x1x1xi32>
    %225 = vector.broadcast %224 : vector<2x1x1xi32> to vector<2x8x128xi32>
    %226 = arith.cmpi sge, %201, %225 : vector<2x8x128xi32>
    %227 = arith.extui %226 : vector<2x8x128xi1> to vector<2x8x128xi32>
    %228 = arith.sitofp %227 : vector<2x8x128xi32> to vector<2x8x128xf32>
    %cst_135 = arith.constant dense<0.000000e+00> : vector<2x8xf32>
    %229 = vector.multi_reduction <add>, %228, %cst_135 [2] : vector<2x8x128xf32> to vector<2x8xf32>
    %230 = vector.shape_cast %229 : vector<2x8xf32> to vector<2x8x1xf32>
    %cst_136 = arith.constant dense<0.000000e+00> : vector<2x1xf32>
    %231 = vector.multi_reduction <add>, %230, %cst_136 [1] : vector<2x8x1xf32> to vector<2x1xf32>
    %232 = vector.shape_cast %231 : vector<2x1xf32> to vector<2x1x1xf32>
    %233 = arith.cmpf oge, %232, %203 : vector<2x1x1xf32>
    %234 = arith.select %233, %224, %219 : vector<2x1x1xi1>, vector<2x1x1xi32>
    %235 = arith.select %233, %220, %224 : vector<2x1x1xi1>, vector<2x1x1xi32>
    %c2_i32_137 = arith.constant 2 : i32
    %236 = arith.subi %235, %234 : vector<2x1x1xi32>
    %c1_i32_138 = arith.constant 1 : i32
    %237 = vector.broadcast %c1_i32_138 : i32 to vector<2x1x1xi32>
    %238 = arith.shrsi %236, %237 : vector<2x1x1xi32>
    %239 = arith.addi %234, %238 : vector<2x1x1xi32>
    %240 = vector.broadcast %239 : vector<2x1x1xi32> to vector<2x8x128xi32>
    %241 = arith.cmpi sge, %201, %240 : vector<2x8x128xi32>
    %242 = arith.extui %241 : vector<2x8x128xi1> to vector<2x8x128xi32>
    %243 = arith.sitofp %242 : vector<2x8x128xi32> to vector<2x8x128xf32>
    %cst_139 = arith.constant dense<0.000000e+00> : vector<2x8xf32>
    %244 = vector.multi_reduction <add>, %243, %cst_139 [2] : vector<2x8x128xf32> to vector<2x8xf32>
    %245 = vector.shape_cast %244 : vector<2x8xf32> to vector<2x8x1xf32>
    %cst_140 = arith.constant dense<0.000000e+00> : vector<2x1xf32>
    %246 = vector.multi_reduction <add>, %245, %cst_140 [1] : vector<2x8x1xf32> to vector<2x1xf32>
    %247 = vector.shape_cast %246 : vector<2x1xf32> to vector<2x1x1xf32>
    %248 = arith.cmpf oge, %247, %203 : vector<2x1x1xf32>
    %249 = arith.select %248, %239, %234 : vector<2x1x1xi1>, vector<2x1x1xi32>
    %250 = arith.select %248, %235, %239 : vector<2x1x1xi1>, vector<2x1x1xi32>
    %c3_i32_141 = arith.constant 3 : i32
    %251 = arith.subi %250, %249 : vector<2x1x1xi32>
    %c1_i32_142 = arith.constant 1 : i32
    %252 = vector.broadcast %c1_i32_142 : i32 to vector<2x1x1xi32>
    %253 = arith.shrsi %251, %252 : vector<2x1x1xi32>
    %254 = arith.addi %249, %253 : vector<2x1x1xi32>
    %255 = vector.broadcast %254 : vector<2x1x1xi32> to vector<2x8x128xi32>
    %256 = arith.cmpi sge, %201, %255 : vector<2x8x128xi32>
    %257 = arith.extui %256 : vector<2x8x128xi1> to vector<2x8x128xi32>
    %258 = arith.sitofp %257 : vector<2x8x128xi32> to vector<2x8x128xf32>
    %cst_143 = arith.constant dense<0.000000e+00> : vector<2x8xf32>
    %259 = vector.multi_reduction <add>, %258, %cst_143 [2] : vector<2x8x128xf32> to vector<2x8xf32>
    %260 = vector.shape_cast %259 : vector<2x8xf32> to vector<2x8x1xf32>
    %cst_144 = arith.constant dense<0.000000e+00> : vector<2x1xf32>
    %261 = vector.multi_reduction <add>, %260, %cst_144 [1] : vector<2x8x1xf32> to vector<2x1xf32>
    %262 = vector.shape_cast %261 : vector<2x1xf32> to vector<2x1x1xf32>
    %263 = arith.cmpf oge, %262, %203 : vector<2x1x1xf32>
    %264 = arith.select %263, %254, %249 : vector<2x1x1xi1>, vector<2x1x1xi32>
    %265 = arith.select %263, %250, %254 : vector<2x1x1xi1>, vector<2x1x1xi32>
    %c4_i32_145 = arith.constant 4 : i32
    %266 = arith.subi %265, %264 : vector<2x1x1xi32>
    %c1_i32_146 = arith.constant 1 : i32
    %267 = vector.broadcast %c1_i32_146 : i32 to vector<2x1x1xi32>
    %268 = arith.shrsi %266, %267 : vector<2x1x1xi32>
    %269 = arith.addi %264, %268 : vector<2x1x1xi32>
    %270 = vector.broadcast %269 : vector<2x1x1xi32> to vector<2x8x128xi32>
    %271 = arith.cmpi sge, %201, %270 : vector<2x8x128xi32>
    %272 = arith.extui %271 : vector<2x8x128xi1> to vector<2x8x128xi32>
    %273 = arith.sitofp %272 : vector<2x8x128xi32> to vector<2x8x128xf32>
    %cst_147 = arith.constant dense<0.000000e+00> : vector<2x8xf32>
    %274 = vector.multi_reduction <add>, %273, %cst_147 [2] : vector<2x8x128xf32> to vector<2x8xf32>
    %275 = vector.shape_cast %274 : vector<2x8xf32> to vector<2x8x1xf32>
    %cst_148 = arith.constant dense<0.000000e+00> : vector<2x1xf32>
    %276 = vector.multi_reduction <add>, %275, %cst_148 [1] : vector<2x8x1xf32> to vector<2x1xf32>
    %277 = vector.shape_cast %276 : vector<2x1xf32> to vector<2x1x1xf32>
    %278 = arith.cmpf oge, %277, %203 : vector<2x1x1xf32>
    %279 = arith.select %278, %269, %264 : vector<2x1x1xi1>, vector<2x1x1xi32>
    %280 = arith.select %278, %265, %269 : vector<2x1x1xi1>, vector<2x1x1xi32>
    %c5_i32_149 = arith.constant 5 : i32
    %281 = arith.subi %280, %279 : vector<2x1x1xi32>
    %c1_i32_150 = arith.constant 1 : i32
    %282 = vector.broadcast %c1_i32_150 : i32 to vector<2x1x1xi32>
    %283 = arith.shrsi %281, %282 : vector<2x1x1xi32>
    %284 = arith.addi %279, %283 : vector<2x1x1xi32>
    %285 = vector.broadcast %284 : vector<2x1x1xi32> to vector<2x8x128xi32>
    %286 = arith.cmpi sge, %201, %285 : vector<2x8x128xi32>
    %287 = arith.extui %286 : vector<2x8x128xi1> to vector<2x8x128xi32>
    %288 = arith.sitofp %287 : vector<2x8x128xi32> to vector<2x8x128xf32>
    %cst_151 = arith.constant dense<0.000000e+00> : vector<2x8xf32>
    %289 = vector.multi_reduction <add>, %288, %cst_151 [2] : vector<2x8x128xf32> to vector<2x8xf32>
    %290 = vector.shape_cast %289 : vector<2x8xf32> to vector<2x8x1xf32>
    %cst_152 = arith.constant dense<0.000000e+00> : vector<2x1xf32>
    %291 = vector.multi_reduction <add>, %290, %cst_152 [1] : vector<2x8x1xf32> to vector<2x1xf32>
    %292 = vector.shape_cast %291 : vector<2x1xf32> to vector<2x1x1xf32>
    %293 = arith.cmpf oge, %292, %203 : vector<2x1x1xf32>
    %294 = arith.select %293, %284, %279 : vector<2x1x1xi1>, vector<2x1x1xi32>
    %295 = arith.select %293, %280, %284 : vector<2x1x1xi1>, vector<2x1x1xi32>
    %c6_i32_153 = arith.constant 6 : i32
    %296 = arith.subi %295, %294 : vector<2x1x1xi32>
    %c1_i32_154 = arith.constant 1 : i32
    %297 = vector.broadcast %c1_i32_154 : i32 to vector<2x1x1xi32>
    %298 = arith.shrsi %296, %297 : vector<2x1x1xi32>
    %299 = arith.addi %294, %298 : vector<2x1x1xi32>
    %300 = vector.broadcast %299 : vector<2x1x1xi32> to vector<2x8x128xi32>
    %301 = arith.cmpi sge, %201, %300 : vector<2x8x128xi32>
    %302 = arith.extui %301 : vector<2x8x128xi1> to vector<2x8x128xi32>
    %303 = arith.sitofp %302 : vector<2x8x128xi32> to vector<2x8x128xf32>
    %cst_155 = arith.constant dense<0.000000e+00> : vector<2x8xf32>
    %304 = vector.multi_reduction <add>, %303, %cst_155 [2] : vector<2x8x128xf32> to vector<2x8xf32>
    %305 = vector.shape_cast %304 : vector<2x8xf32> to vector<2x8x1xf32>
    %cst_156 = arith.constant dense<0.000000e+00> : vector<2x1xf32>
    %306 = vector.multi_reduction <add>, %305, %cst_156 [1] : vector<2x8x1xf32> to vector<2x1xf32>
    %307 = vector.shape_cast %306 : vector<2x1xf32> to vector<2x1x1xf32>
    %308 = arith.cmpf oge, %307, %203 : vector<2x1x1xf32>
    %309 = arith.select %308, %299, %294 : vector<2x1x1xi1>, vector<2x1x1xi32>
    %310 = arith.select %308, %295, %299 : vector<2x1x1xi1>, vector<2x1x1xi32>
    %c7_i32_157 = arith.constant 7 : i32
    %311 = arith.subi %310, %309 : vector<2x1x1xi32>
    %c1_i32_158 = arith.constant 1 : i32
    %312 = vector.broadcast %c1_i32_158 : i32 to vector<2x1x1xi32>
    %313 = arith.shrsi %311, %312 : vector<2x1x1xi32>
    %314 = arith.addi %309, %313 : vector<2x1x1xi32>
    %315 = vector.broadcast %314 : vector<2x1x1xi32> to vector<2x8x128xi32>
    %316 = arith.cmpi sge, %201, %315 : vector<2x8x128xi32>
    %317 = arith.extui %316 : vector<2x8x128xi1> to vector<2x8x128xi32>
    %318 = arith.sitofp %317 : vector<2x8x128xi32> to vector<2x8x128xf32>
    %cst_159 = arith.constant dense<0.000000e+00> : vector<2x8xf32>
    %319 = vector.multi_reduction <add>, %318, %cst_159 [2] : vector<2x8x128xf32> to vector<2x8xf32>
    %320 = vector.shape_cast %319 : vector<2x8xf32> to vector<2x8x1xf32>
    %cst_160 = arith.constant dense<0.000000e+00> : vector<2x1xf32>
    %321 = vector.multi_reduction <add>, %320, %cst_160 [1] : vector<2x8x1xf32> to vector<2x1xf32>
    %322 = vector.shape_cast %321 : vector<2x1xf32> to vector<2x1x1xf32>
    %323 = arith.cmpf oge, %322, %203 : vector<2x1x1xf32>
    %324 = arith.select %323, %314, %309 : vector<2x1x1xi1>, vector<2x1x1xi32>
    %325 = arith.select %323, %310, %314 : vector<2x1x1xi1>, vector<2x1x1xi32>
    %c8_i32 = arith.constant 8 : i32
    %326 = arith.subi %325, %324 : vector<2x1x1xi32>
    %c1_i32_161 = arith.constant 1 : i32
    %327 = vector.broadcast %c1_i32_161 : i32 to vector<2x1x1xi32>
    %328 = arith.shrsi %326, %327 : vector<2x1x1xi32>
    %329 = arith.addi %324, %328 : vector<2x1x1xi32>
    %330 = vector.broadcast %329 : vector<2x1x1xi32> to vector<2x8x128xi32>
    %331 = arith.cmpi sge, %201, %330 : vector<2x8x128xi32>
    %332 = arith.extui %331 : vector<2x8x128xi1> to vector<2x8x128xi32>
    %333 = arith.sitofp %332 : vector<2x8x128xi32> to vector<2x8x128xf32>
    %cst_162 = arith.constant dense<0.000000e+00> : vector<2x8xf32>
    %334 = vector.multi_reduction <add>, %333, %cst_162 [2] : vector<2x8x128xf32> to vector<2x8xf32>
    %335 = vector.shape_cast %334 : vector<2x8xf32> to vector<2x8x1xf32>
    %cst_163 = arith.constant dense<0.000000e+00> : vector<2x1xf32>
    %336 = vector.multi_reduction <add>, %335, %cst_163 [1] : vector<2x8x1xf32> to vector<2x1xf32>
    %337 = vector.shape_cast %336 : vector<2x1xf32> to vector<2x1x1xf32>
    %338 = arith.cmpf oge, %337, %203 : vector<2x1x1xf32>
    %339 = arith.select %338, %329, %324 : vector<2x1x1xi1>, vector<2x1x1xi32>
    %340 = arith.select %338, %325, %329 : vector<2x1x1xi1>, vector<2x1x1xi32>
    %c9_i32 = arith.constant 9 : i32
    %341 = arith.subi %340, %339 : vector<2x1x1xi32>
    %c1_i32_164 = arith.constant 1 : i32
    %342 = vector.broadcast %c1_i32_164 : i32 to vector<2x1x1xi32>
    %343 = arith.shrsi %341, %342 : vector<2x1x1xi32>
    %344 = arith.addi %339, %343 : vector<2x1x1xi32>
    %345 = vector.broadcast %344 : vector<2x1x1xi32> to vector<2x8x128xi32>
    %346 = arith.cmpi sge, %201, %345 : vector<2x8x128xi32>
    %347 = arith.extui %346 : vector<2x8x128xi1> to vector<2x8x128xi32>
    %348 = arith.sitofp %347 : vector<2x8x128xi32> to vector<2x8x128xf32>
    %cst_165 = arith.constant dense<0.000000e+00> : vector<2x8xf32>
    %349 = vector.multi_reduction <add>, %348, %cst_165 [2] : vector<2x8x128xf32> to vector<2x8xf32>
    %350 = vector.shape_cast %349 : vector<2x8xf32> to vector<2x8x1xf32>
    %cst_166 = arith.constant dense<0.000000e+00> : vector<2x1xf32>
    %351 = vector.multi_reduction <add>, %350, %cst_166 [1] : vector<2x8x1xf32> to vector<2x1xf32>
    %352 = vector.shape_cast %351 : vector<2x1xf32> to vector<2x1x1xf32>
    %353 = arith.cmpf oge, %352, %203 : vector<2x1x1xf32>
    %354 = arith.select %353, %344, %339 : vector<2x1x1xi1>, vector<2x1x1xi32>
    %355 = arith.select %353, %340, %344 : vector<2x1x1xi1>, vector<2x1x1xi32>
    %c10_i32 = arith.constant 10 : i32
    %356 = arith.subi %355, %354 : vector<2x1x1xi32>
    %c1_i32_167 = arith.constant 1 : i32
    %357 = vector.broadcast %c1_i32_167 : i32 to vector<2x1x1xi32>
    %358 = arith.shrsi %356, %357 : vector<2x1x1xi32>
    %359 = arith.addi %354, %358 : vector<2x1x1xi32>
    %360 = vector.broadcast %359 : vector<2x1x1xi32> to vector<2x8x128xi32>
    %361 = arith.cmpi sge, %201, %360 : vector<2x8x128xi32>
    %362 = arith.extui %361 : vector<2x8x128xi1> to vector<2x8x128xi32>
    %363 = arith.sitofp %362 : vector<2x8x128xi32> to vector<2x8x128xf32>
    %cst_168 = arith.constant dense<0.000000e+00> : vector<2x8xf32>
    %364 = vector.multi_reduction <add>, %363, %cst_168 [2] : vector<2x8x128xf32> to vector<2x8xf32>
    %365 = vector.shape_cast %364 : vector<2x8xf32> to vector<2x8x1xf32>
    %cst_169 = arith.constant dense<0.000000e+00> : vector<2x1xf32>
    %366 = vector.multi_reduction <add>, %365, %cst_169 [1] : vector<2x8x1xf32> to vector<2x1xf32>
    %367 = vector.shape_cast %366 : vector<2x1xf32> to vector<2x1x1xf32>
    %368 = arith.cmpf oge, %367, %203 : vector<2x1x1xf32>
    %369 = arith.select %368, %359, %354 : vector<2x1x1xi1>, vector<2x1x1xi32>
    %370 = arith.select %368, %355, %359 : vector<2x1x1xi1>, vector<2x1x1xi32>
    %c11_i32 = arith.constant 11 : i32
    %371 = arith.subi %370, %369 : vector<2x1x1xi32>
    %c1_i32_170 = arith.constant 1 : i32
    %372 = vector.broadcast %c1_i32_170 : i32 to vector<2x1x1xi32>
    %373 = arith.shrsi %371, %372 : vector<2x1x1xi32>
    %374 = arith.addi %369, %373 : vector<2x1x1xi32>
    %375 = vector.broadcast %374 : vector<2x1x1xi32> to vector<2x8x128xi32>
    %376 = arith.cmpi sge, %201, %375 : vector<2x8x128xi32>
    %377 = arith.extui %376 : vector<2x8x128xi1> to vector<2x8x128xi32>
    %378 = arith.sitofp %377 : vector<2x8x128xi32> to vector<2x8x128xf32>
    %cst_171 = arith.constant dense<0.000000e+00> : vector<2x8xf32>
    %379 = vector.multi_reduction <add>, %378, %cst_171 [2] : vector<2x8x128xf32> to vector<2x8xf32>
    %380 = vector.shape_cast %379 : vector<2x8xf32> to vector<2x8x1xf32>
    %cst_172 = arith.constant dense<0.000000e+00> : vector<2x1xf32>
    %381 = vector.multi_reduction <add>, %380, %cst_172 [1] : vector<2x8x1xf32> to vector<2x1xf32>
    %382 = vector.shape_cast %381 : vector<2x1xf32> to vector<2x1x1xf32>
    %383 = arith.cmpf oge, %382, %203 : vector<2x1x1xf32>
    %384 = arith.select %383, %374, %369 : vector<2x1x1xi1>, vector<2x1x1xi32>
    %385 = arith.select %383, %370, %374 : vector<2x1x1xi1>, vector<2x1x1xi32>
    %c12_i32 = arith.constant 12 : i32
    %386 = arith.subi %385, %384 : vector<2x1x1xi32>
    %c1_i32_173 = arith.constant 1 : i32
    %387 = vector.broadcast %c1_i32_173 : i32 to vector<2x1x1xi32>
    %388 = arith.shrsi %386, %387 : vector<2x1x1xi32>
    %389 = arith.addi %384, %388 : vector<2x1x1xi32>
    %390 = vector.broadcast %389 : vector<2x1x1xi32> to vector<2x8x128xi32>
    %391 = arith.cmpi sge, %201, %390 : vector<2x8x128xi32>
    %392 = arith.extui %391 : vector<2x8x128xi1> to vector<2x8x128xi32>
    %393 = arith.sitofp %392 : vector<2x8x128xi32> to vector<2x8x128xf32>
    %cst_174 = arith.constant dense<0.000000e+00> : vector<2x8xf32>
    %394 = vector.multi_reduction <add>, %393, %cst_174 [2] : vector<2x8x128xf32> to vector<2x8xf32>
    %395 = vector.shape_cast %394 : vector<2x8xf32> to vector<2x8x1xf32>
    %cst_175 = arith.constant dense<0.000000e+00> : vector<2x1xf32>
    %396 = vector.multi_reduction <add>, %395, %cst_175 [1] : vector<2x8x1xf32> to vector<2x1xf32>
    %397 = vector.shape_cast %396 : vector<2x1xf32> to vector<2x1x1xf32>
    %398 = arith.cmpf oge, %397, %203 : vector<2x1x1xf32>
    %399 = arith.select %398, %389, %384 : vector<2x1x1xi1>, vector<2x1x1xi32>
    %400 = arith.select %398, %385, %389 : vector<2x1x1xi1>, vector<2x1x1xi32>
    %c13_i32 = arith.constant 13 : i32
    %401 = arith.subi %400, %399 : vector<2x1x1xi32>
    %c1_i32_176 = arith.constant 1 : i32
    %402 = vector.broadcast %c1_i32_176 : i32 to vector<2x1x1xi32>
    %403 = arith.shrsi %401, %402 : vector<2x1x1xi32>
    %404 = arith.addi %399, %403 : vector<2x1x1xi32>
    %405 = vector.broadcast %404 : vector<2x1x1xi32> to vector<2x8x128xi32>
    %406 = arith.cmpi sge, %201, %405 : vector<2x8x128xi32>
    %407 = arith.extui %406 : vector<2x8x128xi1> to vector<2x8x128xi32>
    %408 = arith.sitofp %407 : vector<2x8x128xi32> to vector<2x8x128xf32>
    %cst_177 = arith.constant dense<0.000000e+00> : vector<2x8xf32>
    %409 = vector.multi_reduction <add>, %408, %cst_177 [2] : vector<2x8x128xf32> to vector<2x8xf32>
    %410 = vector.shape_cast %409 : vector<2x8xf32> to vector<2x8x1xf32>
    %cst_178 = arith.constant dense<0.000000e+00> : vector<2x1xf32>
    %411 = vector.multi_reduction <add>, %410, %cst_178 [1] : vector<2x8x1xf32> to vector<2x1xf32>
    %412 = vector.shape_cast %411 : vector<2x1xf32> to vector<2x1x1xf32>
    %413 = arith.cmpf oge, %412, %203 : vector<2x1x1xf32>
    %414 = arith.select %413, %404, %399 : vector<2x1x1xi1>, vector<2x1x1xi32>
    %415 = arith.select %413, %400, %404 : vector<2x1x1xi1>, vector<2x1x1xi32>
    %c14_i32 = arith.constant 14 : i32
    %416 = arith.subi %415, %414 : vector<2x1x1xi32>
    %c1_i32_179 = arith.constant 1 : i32
    %417 = vector.broadcast %c1_i32_179 : i32 to vector<2x1x1xi32>
    %418 = arith.shrsi %416, %417 : vector<2x1x1xi32>
    %419 = arith.addi %414, %418 : vector<2x1x1xi32>
    %420 = vector.broadcast %419 : vector<2x1x1xi32> to vector<2x8x128xi32>
    %421 = arith.cmpi sge, %201, %420 : vector<2x8x128xi32>
    %422 = arith.extui %421 : vector<2x8x128xi1> to vector<2x8x128xi32>
    %423 = arith.sitofp %422 : vector<2x8x128xi32> to vector<2x8x128xf32>
    %cst_180 = arith.constant dense<0.000000e+00> : vector<2x8xf32>
    %424 = vector.multi_reduction <add>, %423, %cst_180 [2] : vector<2x8x128xf32> to vector<2x8xf32>
    %425 = vector.shape_cast %424 : vector<2x8xf32> to vector<2x8x1xf32>
    %cst_181 = arith.constant dense<0.000000e+00> : vector<2x1xf32>
    %426 = vector.multi_reduction <add>, %425, %cst_181 [1] : vector<2x8x1xf32> to vector<2x1xf32>
    %427 = vector.shape_cast %426 : vector<2x1xf32> to vector<2x1x1xf32>
    %428 = arith.cmpf oge, %427, %203 : vector<2x1x1xf32>
    %429 = arith.select %428, %419, %414 : vector<2x1x1xi1>, vector<2x1x1xi32>
    %430 = arith.select %428, %415, %419 : vector<2x1x1xi1>, vector<2x1x1xi32>
    %c15_i32 = arith.constant 15 : i32
    %431 = arith.subi %430, %429 : vector<2x1x1xi32>
    %c1_i32_182 = arith.constant 1 : i32
    %432 = vector.broadcast %c1_i32_182 : i32 to vector<2x1x1xi32>
    %433 = arith.shrsi %431, %432 : vector<2x1x1xi32>
    %434 = arith.addi %429, %433 : vector<2x1x1xi32>
    %435 = vector.broadcast %434 : vector<2x1x1xi32> to vector<2x8x128xi32>
    %436 = arith.cmpi sge, %201, %435 : vector<2x8x128xi32>
    %437 = arith.extui %436 : vector<2x8x128xi1> to vector<2x8x128xi32>
    %438 = arith.sitofp %437 : vector<2x8x128xi32> to vector<2x8x128xf32>
    %cst_183 = arith.constant dense<0.000000e+00> : vector<2x8xf32>
    %439 = vector.multi_reduction <add>, %438, %cst_183 [2] : vector<2x8x128xf32> to vector<2x8xf32>
    %440 = vector.shape_cast %439 : vector<2x8xf32> to vector<2x8x1xf32>
    %cst_184 = arith.constant dense<0.000000e+00> : vector<2x1xf32>
    %441 = vector.multi_reduction <add>, %440, %cst_184 [1] : vector<2x8x1xf32> to vector<2x1xf32>
    %442 = vector.shape_cast %441 : vector<2x1xf32> to vector<2x1x1xf32>
    %443 = arith.cmpf oge, %442, %203 : vector<2x1x1xf32>
    %444 = arith.select %443, %434, %429 : vector<2x1x1xi1>, vector<2x1x1xi32>
    %445 = arith.select %443, %430, %434 : vector<2x1x1xi1>, vector<2x1x1xi32>
    %c16_i32 = arith.constant 16 : i32
    %446 = arith.subi %445, %444 : vector<2x1x1xi32>
    %c1_i32_185 = arith.constant 1 : i32
    %447 = vector.broadcast %c1_i32_185 : i32 to vector<2x1x1xi32>
    %448 = arith.shrsi %446, %447 : vector<2x1x1xi32>
    %449 = arith.addi %444, %448 : vector<2x1x1xi32>
    %450 = vector.broadcast %449 : vector<2x1x1xi32> to vector<2x8x128xi32>
    %451 = arith.cmpi sge, %201, %450 : vector<2x8x128xi32>
    %452 = arith.extui %451 : vector<2x8x128xi1> to vector<2x8x128xi32>
    %453 = arith.sitofp %452 : vector<2x8x128xi32> to vector<2x8x128xf32>
    %cst_186 = arith.constant dense<0.000000e+00> : vector<2x8xf32>
    %454 = vector.multi_reduction <add>, %453, %cst_186 [2] : vector<2x8x128xf32> to vector<2x8xf32>
    %455 = vector.shape_cast %454 : vector<2x8xf32> to vector<2x8x1xf32>
    %cst_187 = arith.constant dense<0.000000e+00> : vector<2x1xf32>
    %456 = vector.multi_reduction <add>, %455, %cst_187 [1] : vector<2x8x1xf32> to vector<2x1xf32>
    %457 = vector.shape_cast %456 : vector<2x1xf32> to vector<2x1x1xf32>
    %458 = arith.cmpf oge, %457, %203 : vector<2x1x1xf32>
    %459 = arith.select %458, %449, %444 : vector<2x1x1xi1>, vector<2x1x1xi32>
    %460 = arith.select %458, %445, %449 : vector<2x1x1xi1>, vector<2x1x1xi32>
    %c17_i32 = arith.constant 17 : i32
    %461 = arith.subi %460, %459 : vector<2x1x1xi32>
    %c1_i32_188 = arith.constant 1 : i32
    %462 = vector.broadcast %c1_i32_188 : i32 to vector<2x1x1xi32>
    %463 = arith.shrsi %461, %462 : vector<2x1x1xi32>
    %464 = arith.addi %459, %463 : vector<2x1x1xi32>
    %465 = vector.broadcast %464 : vector<2x1x1xi32> to vector<2x8x128xi32>
    %466 = arith.cmpi sge, %201, %465 : vector<2x8x128xi32>
    %467 = arith.extui %466 : vector<2x8x128xi1> to vector<2x8x128xi32>
    %468 = arith.sitofp %467 : vector<2x8x128xi32> to vector<2x8x128xf32>
    %cst_189 = arith.constant dense<0.000000e+00> : vector<2x8xf32>
    %469 = vector.multi_reduction <add>, %468, %cst_189 [2] : vector<2x8x128xf32> to vector<2x8xf32>
    %470 = vector.shape_cast %469 : vector<2x8xf32> to vector<2x8x1xf32>
    %cst_190 = arith.constant dense<0.000000e+00> : vector<2x1xf32>
    %471 = vector.multi_reduction <add>, %470, %cst_190 [1] : vector<2x8x1xf32> to vector<2x1xf32>
    %472 = vector.shape_cast %471 : vector<2x1xf32> to vector<2x1x1xf32>
    %473 = arith.cmpf oge, %472, %203 : vector<2x1x1xf32>
    %474 = arith.select %473, %464, %459 : vector<2x1x1xi1>, vector<2x1x1xi32>
    %475 = arith.select %473, %460, %464 : vector<2x1x1xi1>, vector<2x1x1xi32>
    %c18_i32 = arith.constant 18 : i32
    %476 = arith.subi %475, %474 : vector<2x1x1xi32>
    %c1_i32_191 = arith.constant 1 : i32
    %477 = vector.broadcast %c1_i32_191 : i32 to vector<2x1x1xi32>
    %478 = arith.shrsi %476, %477 : vector<2x1x1xi32>
    %479 = arith.addi %474, %478 : vector<2x1x1xi32>
    %480 = vector.broadcast %479 : vector<2x1x1xi32> to vector<2x8x128xi32>
    %481 = arith.cmpi sge, %201, %480 : vector<2x8x128xi32>
    %482 = arith.extui %481 : vector<2x8x128xi1> to vector<2x8x128xi32>
    %483 = arith.sitofp %482 : vector<2x8x128xi32> to vector<2x8x128xf32>
    %cst_192 = arith.constant dense<0.000000e+00> : vector<2x8xf32>
    %484 = vector.multi_reduction <add>, %483, %cst_192 [2] : vector<2x8x128xf32> to vector<2x8xf32>
    %485 = vector.shape_cast %484 : vector<2x8xf32> to vector<2x8x1xf32>
    %cst_193 = arith.constant dense<0.000000e+00> : vector<2x1xf32>
    %486 = vector.multi_reduction <add>, %485, %cst_193 [1] : vector<2x8x1xf32> to vector<2x1xf32>
    %487 = vector.shape_cast %486 : vector<2x1xf32> to vector<2x1x1xf32>
    %488 = arith.cmpf oge, %487, %203 : vector<2x1x1xf32>
    %489 = arith.select %488, %479, %474 : vector<2x1x1xi1>, vector<2x1x1xi32>
    %490 = arith.select %488, %475, %479 : vector<2x1x1xi1>, vector<2x1x1xi32>
    %c19_i32 = arith.constant 19 : i32
    %491 = arith.subi %490, %489 : vector<2x1x1xi32>
    %c1_i32_194 = arith.constant 1 : i32
    %492 = vector.broadcast %c1_i32_194 : i32 to vector<2x1x1xi32>
    %493 = arith.shrsi %491, %492 : vector<2x1x1xi32>
    %494 = arith.addi %489, %493 : vector<2x1x1xi32>
    %495 = vector.broadcast %494 : vector<2x1x1xi32> to vector<2x8x128xi32>
    %496 = arith.cmpi sge, %201, %495 : vector<2x8x128xi32>
    %497 = arith.extui %496 : vector<2x8x128xi1> to vector<2x8x128xi32>
    %498 = arith.sitofp %497 : vector<2x8x128xi32> to vector<2x8x128xf32>
    %cst_195 = arith.constant dense<0.000000e+00> : vector<2x8xf32>
    %499 = vector.multi_reduction <add>, %498, %cst_195 [2] : vector<2x8x128xf32> to vector<2x8xf32>
    %500 = vector.shape_cast %499 : vector<2x8xf32> to vector<2x8x1xf32>
    %cst_196 = arith.constant dense<0.000000e+00> : vector<2x1xf32>
    %501 = vector.multi_reduction <add>, %500, %cst_196 [1] : vector<2x8x1xf32> to vector<2x1xf32>
    %502 = vector.shape_cast %501 : vector<2x1xf32> to vector<2x1x1xf32>
    %503 = arith.cmpf oge, %502, %203 : vector<2x1x1xf32>
    %504 = arith.select %503, %494, %489 : vector<2x1x1xi1>, vector<2x1x1xi32>
    %505 = arith.select %503, %490, %494 : vector<2x1x1xi1>, vector<2x1x1xi32>
    %c20_i32 = arith.constant 20 : i32
    %506 = arith.subi %505, %504 : vector<2x1x1xi32>
    %c1_i32_197 = arith.constant 1 : i32
    %507 = vector.broadcast %c1_i32_197 : i32 to vector<2x1x1xi32>
    %508 = arith.shrsi %506, %507 : vector<2x1x1xi32>
    %509 = arith.addi %504, %508 : vector<2x1x1xi32>
    %510 = vector.broadcast %509 : vector<2x1x1xi32> to vector<2x8x128xi32>
    %511 = arith.cmpi sge, %201, %510 : vector<2x8x128xi32>
    %512 = arith.extui %511 : vector<2x8x128xi1> to vector<2x8x128xi32>
    %513 = arith.sitofp %512 : vector<2x8x128xi32> to vector<2x8x128xf32>
    %cst_198 = arith.constant dense<0.000000e+00> : vector<2x8xf32>
    %514 = vector.multi_reduction <add>, %513, %cst_198 [2] : vector<2x8x128xf32> to vector<2x8xf32>
    %515 = vector.shape_cast %514 : vector<2x8xf32> to vector<2x8x1xf32>
    %cst_199 = arith.constant dense<0.000000e+00> : vector<2x1xf32>
    %516 = vector.multi_reduction <add>, %515, %cst_199 [1] : vector<2x8x1xf32> to vector<2x1xf32>
    %517 = vector.shape_cast %516 : vector<2x1xf32> to vector<2x1x1xf32>
    %518 = arith.cmpf oge, %517, %203 : vector<2x1x1xf32>
    %519 = arith.select %518, %509, %504 : vector<2x1x1xi1>, vector<2x1x1xi32>
    %520 = arith.select %518, %505, %509 : vector<2x1x1xi1>, vector<2x1x1xi32>
    %c21_i32 = arith.constant 21 : i32
    %521 = arith.subi %520, %519 : vector<2x1x1xi32>
    %c1_i32_200 = arith.constant 1 : i32
    %522 = vector.broadcast %c1_i32_200 : i32 to vector<2x1x1xi32>
    %523 = arith.shrsi %521, %522 : vector<2x1x1xi32>
    %524 = arith.addi %519, %523 : vector<2x1x1xi32>
    %525 = vector.broadcast %524 : vector<2x1x1xi32> to vector<2x8x128xi32>
    %526 = arith.cmpi sge, %201, %525 : vector<2x8x128xi32>
    %527 = arith.extui %526 : vector<2x8x128xi1> to vector<2x8x128xi32>
    %528 = arith.sitofp %527 : vector<2x8x128xi32> to vector<2x8x128xf32>
    %cst_201 = arith.constant dense<0.000000e+00> : vector<2x8xf32>
    %529 = vector.multi_reduction <add>, %528, %cst_201 [2] : vector<2x8x128xf32> to vector<2x8xf32>
    %530 = vector.shape_cast %529 : vector<2x8xf32> to vector<2x8x1xf32>
    %cst_202 = arith.constant dense<0.000000e+00> : vector<2x1xf32>
    %531 = vector.multi_reduction <add>, %530, %cst_202 [1] : vector<2x8x1xf32> to vector<2x1xf32>
    %532 = vector.shape_cast %531 : vector<2x1xf32> to vector<2x1x1xf32>
    %533 = arith.cmpf oge, %532, %203 : vector<2x1x1xf32>
    %534 = arith.select %533, %524, %519 : vector<2x1x1xi1>, vector<2x1x1xi32>
    %535 = arith.select %533, %520, %524 : vector<2x1x1xi1>, vector<2x1x1xi32>
    %c22_i32 = arith.constant 22 : i32
    %536 = arith.subi %535, %534 : vector<2x1x1xi32>
    %c1_i32_203 = arith.constant 1 : i32
    %537 = vector.broadcast %c1_i32_203 : i32 to vector<2x1x1xi32>
    %538 = arith.shrsi %536, %537 : vector<2x1x1xi32>
    %539 = arith.addi %534, %538 : vector<2x1x1xi32>
    %540 = vector.broadcast %539 : vector<2x1x1xi32> to vector<2x8x128xi32>
    %541 = arith.cmpi sge, %201, %540 : vector<2x8x128xi32>
    %542 = arith.extui %541 : vector<2x8x128xi1> to vector<2x8x128xi32>
    %543 = arith.sitofp %542 : vector<2x8x128xi32> to vector<2x8x128xf32>
    %cst_204 = arith.constant dense<0.000000e+00> : vector<2x8xf32>
    %544 = vector.multi_reduction <add>, %543, %cst_204 [2] : vector<2x8x128xf32> to vector<2x8xf32>
    %545 = vector.shape_cast %544 : vector<2x8xf32> to vector<2x8x1xf32>
    %cst_205 = arith.constant dense<0.000000e+00> : vector<2x1xf32>
    %546 = vector.multi_reduction <add>, %545, %cst_205 [1] : vector<2x8x1xf32> to vector<2x1xf32>
    %547 = vector.shape_cast %546 : vector<2x1xf32> to vector<2x1x1xf32>
    %548 = arith.cmpf oge, %547, %203 : vector<2x1x1xf32>
    %549 = arith.select %548, %539, %534 : vector<2x1x1xi1>, vector<2x1x1xi32>
    %550 = arith.select %548, %535, %539 : vector<2x1x1xi1>, vector<2x1x1xi32>
    %c23_i32 = arith.constant 23 : i32
    %551 = arith.subi %550, %549 : vector<2x1x1xi32>
    %c1_i32_206 = arith.constant 1 : i32
    %552 = vector.broadcast %c1_i32_206 : i32 to vector<2x1x1xi32>
    %553 = arith.shrsi %551, %552 : vector<2x1x1xi32>
    %554 = arith.addi %549, %553 : vector<2x1x1xi32>
    %555 = vector.broadcast %554 : vector<2x1x1xi32> to vector<2x8x128xi32>
    %556 = arith.cmpi sge, %201, %555 : vector<2x8x128xi32>
    %557 = arith.extui %556 : vector<2x8x128xi1> to vector<2x8x128xi32>
    %558 = arith.sitofp %557 : vector<2x8x128xi32> to vector<2x8x128xf32>
    %cst_207 = arith.constant dense<0.000000e+00> : vector<2x8xf32>
    %559 = vector.multi_reduction <add>, %558, %cst_207 [2] : vector<2x8x128xf32> to vector<2x8xf32>
    %560 = vector.shape_cast %559 : vector<2x8xf32> to vector<2x8x1xf32>
    %cst_208 = arith.constant dense<0.000000e+00> : vector<2x1xf32>
    %561 = vector.multi_reduction <add>, %560, %cst_208 [1] : vector<2x8x1xf32> to vector<2x1xf32>
    %562 = vector.shape_cast %561 : vector<2x1xf32> to vector<2x1x1xf32>
    %563 = arith.cmpf oge, %562, %203 : vector<2x1x1xf32>
    %564 = arith.select %563, %554, %549 : vector<2x1x1xi1>, vector<2x1x1xi32>
    %565 = arith.select %563, %550, %554 : vector<2x1x1xi1>, vector<2x1x1xi32>
    %c24_i32 = arith.constant 24 : i32
    %566 = arith.subi %565, %564 : vector<2x1x1xi32>
    %c1_i32_209 = arith.constant 1 : i32
    %567 = vector.broadcast %c1_i32_209 : i32 to vector<2x1x1xi32>
    %568 = arith.shrsi %566, %567 : vector<2x1x1xi32>
    %569 = arith.addi %564, %568 : vector<2x1x1xi32>
    %570 = vector.broadcast %569 : vector<2x1x1xi32> to vector<2x8x128xi32>
    %571 = arith.cmpi sge, %201, %570 : vector<2x8x128xi32>
    %572 = arith.extui %571 : vector<2x8x128xi1> to vector<2x8x128xi32>
    %573 = arith.sitofp %572 : vector<2x8x128xi32> to vector<2x8x128xf32>
    %cst_210 = arith.constant dense<0.000000e+00> : vector<2x8xf32>
    %574 = vector.multi_reduction <add>, %573, %cst_210 [2] : vector<2x8x128xf32> to vector<2x8xf32>
    %575 = vector.shape_cast %574 : vector<2x8xf32> to vector<2x8x1xf32>
    %cst_211 = arith.constant dense<0.000000e+00> : vector<2x1xf32>
    %576 = vector.multi_reduction <add>, %575, %cst_211 [1] : vector<2x8x1xf32> to vector<2x1xf32>
    %577 = vector.shape_cast %576 : vector<2x1xf32> to vector<2x1x1xf32>
    %578 = arith.cmpf oge, %577, %203 : vector<2x1x1xf32>
    %579 = arith.select %578, %569, %564 : vector<2x1x1xi1>, vector<2x1x1xi32>
    %580 = arith.select %578, %565, %569 : vector<2x1x1xi1>, vector<2x1x1xi32>
    %c25_i32 = arith.constant 25 : i32
    %581 = arith.subi %580, %579 : vector<2x1x1xi32>
    %c1_i32_212 = arith.constant 1 : i32
    %582 = vector.broadcast %c1_i32_212 : i32 to vector<2x1x1xi32>
    %583 = arith.shrsi %581, %582 : vector<2x1x1xi32>
    %584 = arith.addi %579, %583 : vector<2x1x1xi32>
    %585 = vector.broadcast %584 : vector<2x1x1xi32> to vector<2x8x128xi32>
    %586 = arith.cmpi sge, %201, %585 : vector<2x8x128xi32>
    %587 = arith.extui %586 : vector<2x8x128xi1> to vector<2x8x128xi32>
    %588 = arith.sitofp %587 : vector<2x8x128xi32> to vector<2x8x128xf32>
    %cst_213 = arith.constant dense<0.000000e+00> : vector<2x8xf32>
    %589 = vector.multi_reduction <add>, %588, %cst_213 [2] : vector<2x8x128xf32> to vector<2x8xf32>
    %590 = vector.shape_cast %589 : vector<2x8xf32> to vector<2x8x1xf32>
    %cst_214 = arith.constant dense<0.000000e+00> : vector<2x1xf32>
    %591 = vector.multi_reduction <add>, %590, %cst_214 [1] : vector<2x8x1xf32> to vector<2x1xf32>
    %592 = vector.shape_cast %591 : vector<2x1xf32> to vector<2x1x1xf32>
    %593 = arith.cmpf oge, %592, %203 : vector<2x1x1xf32>
    %594 = arith.select %593, %584, %579 : vector<2x1x1xi1>, vector<2x1x1xi32>
    %595 = arith.select %593, %580, %584 : vector<2x1x1xi1>, vector<2x1x1xi32>
    %c26_i32 = arith.constant 26 : i32
    %596 = arith.subi %595, %594 : vector<2x1x1xi32>
    %c1_i32_215 = arith.constant 1 : i32
    %597 = vector.broadcast %c1_i32_215 : i32 to vector<2x1x1xi32>
    %598 = arith.shrsi %596, %597 : vector<2x1x1xi32>
    %599 = arith.addi %594, %598 : vector<2x1x1xi32>
    %600 = vector.broadcast %599 : vector<2x1x1xi32> to vector<2x8x128xi32>
    %601 = arith.cmpi sge, %201, %600 : vector<2x8x128xi32>
    %602 = arith.extui %601 : vector<2x8x128xi1> to vector<2x8x128xi32>
    %603 = arith.sitofp %602 : vector<2x8x128xi32> to vector<2x8x128xf32>
    %cst_216 = arith.constant dense<0.000000e+00> : vector<2x8xf32>
    %604 = vector.multi_reduction <add>, %603, %cst_216 [2] : vector<2x8x128xf32> to vector<2x8xf32>
    %605 = vector.shape_cast %604 : vector<2x8xf32> to vector<2x8x1xf32>
    %cst_217 = arith.constant dense<0.000000e+00> : vector<2x1xf32>
    %606 = vector.multi_reduction <add>, %605, %cst_217 [1] : vector<2x8x1xf32> to vector<2x1xf32>
    %607 = vector.shape_cast %606 : vector<2x1xf32> to vector<2x1x1xf32>
    %608 = arith.cmpf oge, %607, %203 : vector<2x1x1xf32>
    %609 = arith.select %608, %599, %594 : vector<2x1x1xi1>, vector<2x1x1xi32>
    %610 = arith.select %608, %595, %599 : vector<2x1x1xi1>, vector<2x1x1xi32>
    %c27_i32 = arith.constant 27 : i32
    %611 = arith.subi %610, %609 : vector<2x1x1xi32>
    %c1_i32_218 = arith.constant 1 : i32
    %612 = vector.broadcast %c1_i32_218 : i32 to vector<2x1x1xi32>
    %613 = arith.shrsi %611, %612 : vector<2x1x1xi32>
    %614 = arith.addi %609, %613 : vector<2x1x1xi32>
    %615 = vector.broadcast %614 : vector<2x1x1xi32> to vector<2x8x128xi32>
    %616 = arith.cmpi sge, %201, %615 : vector<2x8x128xi32>
    %617 = arith.extui %616 : vector<2x8x128xi1> to vector<2x8x128xi32>
    %618 = arith.sitofp %617 : vector<2x8x128xi32> to vector<2x8x128xf32>
    %cst_219 = arith.constant dense<0.000000e+00> : vector<2x8xf32>
    %619 = vector.multi_reduction <add>, %618, %cst_219 [2] : vector<2x8x128xf32> to vector<2x8xf32>
    %620 = vector.shape_cast %619 : vector<2x8xf32> to vector<2x8x1xf32>
    %cst_220 = arith.constant dense<0.000000e+00> : vector<2x1xf32>
    %621 = vector.multi_reduction <add>, %620, %cst_220 [1] : vector<2x8x1xf32> to vector<2x1xf32>
    %622 = vector.shape_cast %621 : vector<2x1xf32> to vector<2x1x1xf32>
    %623 = arith.cmpf oge, %622, %203 : vector<2x1x1xf32>
    %624 = arith.select %623, %614, %609 : vector<2x1x1xi1>, vector<2x1x1xi32>
    %625 = arith.select %623, %610, %614 : vector<2x1x1xi1>, vector<2x1x1xi32>
    %c28_i32 = arith.constant 28 : i32
    %626 = arith.subi %625, %624 : vector<2x1x1xi32>
    %c1_i32_221 = arith.constant 1 : i32
    %627 = vector.broadcast %c1_i32_221 : i32 to vector<2x1x1xi32>
    %628 = arith.shrsi %626, %627 : vector<2x1x1xi32>
    %629 = arith.addi %624, %628 : vector<2x1x1xi32>
    %630 = vector.broadcast %629 : vector<2x1x1xi32> to vector<2x8x128xi32>
    %631 = arith.cmpi sge, %201, %630 : vector<2x8x128xi32>
    %632 = arith.extui %631 : vector<2x8x128xi1> to vector<2x8x128xi32>
    %633 = arith.sitofp %632 : vector<2x8x128xi32> to vector<2x8x128xf32>
    %cst_222 = arith.constant dense<0.000000e+00> : vector<2x8xf32>
    %634 = vector.multi_reduction <add>, %633, %cst_222 [2] : vector<2x8x128xf32> to vector<2x8xf32>
    %635 = vector.shape_cast %634 : vector<2x8xf32> to vector<2x8x1xf32>
    %cst_223 = arith.constant dense<0.000000e+00> : vector<2x1xf32>
    %636 = vector.multi_reduction <add>, %635, %cst_223 [1] : vector<2x8x1xf32> to vector<2x1xf32>
    %637 = vector.shape_cast %636 : vector<2x1xf32> to vector<2x1x1xf32>
    %638 = arith.cmpf oge, %637, %203 : vector<2x1x1xf32>
    %639 = arith.select %638, %629, %624 : vector<2x1x1xi1>, vector<2x1x1xi32>
    %640 = arith.select %638, %625, %629 : vector<2x1x1xi1>, vector<2x1x1xi32>
    %c29_i32 = arith.constant 29 : i32
    %641 = arith.subi %640, %639 : vector<2x1x1xi32>
    %c1_i32_224 = arith.constant 1 : i32
    %642 = vector.broadcast %c1_i32_224 : i32 to vector<2x1x1xi32>
    %643 = arith.shrsi %641, %642 : vector<2x1x1xi32>
    %644 = arith.addi %639, %643 : vector<2x1x1xi32>
    %645 = vector.broadcast %644 : vector<2x1x1xi32> to vector<2x8x128xi32>
    %646 = arith.cmpi sge, %201, %645 : vector<2x8x128xi32>
    %647 = arith.extui %646 : vector<2x8x128xi1> to vector<2x8x128xi32>
    %648 = arith.sitofp %647 : vector<2x8x128xi32> to vector<2x8x128xf32>
    %cst_225 = arith.constant dense<0.000000e+00> : vector<2x8xf32>
    %649 = vector.multi_reduction <add>, %648, %cst_225 [2] : vector<2x8x128xf32> to vector<2x8xf32>
    %650 = vector.shape_cast %649 : vector<2x8xf32> to vector<2x8x1xf32>
    %cst_226 = arith.constant dense<0.000000e+00> : vector<2x1xf32>
    %651 = vector.multi_reduction <add>, %650, %cst_226 [1] : vector<2x8x1xf32> to vector<2x1xf32>
    %652 = vector.shape_cast %651 : vector<2x1xf32> to vector<2x1x1xf32>
    %653 = arith.cmpf oge, %652, %203 : vector<2x1x1xf32>
    %654 = arith.select %653, %644, %639 : vector<2x1x1xi1>, vector<2x1x1xi32>
    %655 = arith.select %653, %640, %644 : vector<2x1x1xi1>, vector<2x1x1xi32>
    %c30_i32 = arith.constant 30 : i32
    %656 = arith.subi %655, %654 : vector<2x1x1xi32>
    %c1_i32_227 = arith.constant 1 : i32
    %657 = vector.broadcast %c1_i32_227 : i32 to vector<2x1x1xi32>
    %658 = arith.shrsi %656, %657 : vector<2x1x1xi32>
    %659 = arith.addi %654, %658 : vector<2x1x1xi32>
    %660 = vector.broadcast %659 : vector<2x1x1xi32> to vector<2x8x128xi32>
    %661 = arith.cmpi sge, %201, %660 : vector<2x8x128xi32>
    %662 = arith.extui %661 : vector<2x8x128xi1> to vector<2x8x128xi32>
    %663 = arith.sitofp %662 : vector<2x8x128xi32> to vector<2x8x128xf32>
    %cst_228 = arith.constant dense<0.000000e+00> : vector<2x8xf32>
    %664 = vector.multi_reduction <add>, %663, %cst_228 [2] : vector<2x8x128xf32> to vector<2x8xf32>
    %665 = vector.shape_cast %664 : vector<2x8xf32> to vector<2x8x1xf32>
    %cst_229 = arith.constant dense<0.000000e+00> : vector<2x1xf32>
    %666 = vector.multi_reduction <add>, %665, %cst_229 [1] : vector<2x8x1xf32> to vector<2x1xf32>
    %667 = vector.shape_cast %666 : vector<2x1xf32> to vector<2x1x1xf32>
    %668 = arith.cmpf oge, %667, %203 : vector<2x1x1xf32>
    %669 = arith.select %668, %659, %654 : vector<2x1x1xi1>, vector<2x1x1xi32>
    %670 = arith.select %668, %655, %659 : vector<2x1x1xi1>, vector<2x1x1xi32>
    %671 = vector.broadcast %669 : vector<2x1x1xi32> to vector<2x8x128xi32>
    %672 = arith.cmpi sgt, %201, %671 : vector<2x8x128xi32>
    %673 = arith.extui %672 : vector<2x8x128xi1> to vector<2x8x128xi32>
    %674 = arith.sitofp %673 : vector<2x8x128xi32> to vector<2x8x128xf32>
    %cst_230 = arith.constant dense<0.000000e+00> : vector<2x8xf32>
    %675 = vector.multi_reduction <add>, %674, %cst_230 [2] : vector<2x8x128xf32> to vector<2x8xf32>
    %676 = vector.shape_cast %675 : vector<2x8xf32> to vector<2x8x1xf32>
    %cst_231 = arith.constant dense<0.000000e+00> : vector<2x1xf32>
    %677 = vector.multi_reduction <add>, %676, %cst_231 [1] : vector<2x8x1xf32> to vector<2x1xf32>
    %678 = vector.shape_cast %677 : vector<2x1xf32> to vector<2x1x1xf32>
    %679 = arith.mulf %200, %674 : vector<2x8x128xf32>
    %cst_232 = arith.constant dense<0.000000e+00> : vector<2x8xf32>
    %680 = vector.multi_reduction <add>, %679, %cst_232 [2] : vector<2x8x128xf32> to vector<2x8xf32>
    %681 = vector.shape_cast %680 : vector<2x8xf32> to vector<2x8x1xf32>
    %cst_233 = arith.constant dense<0.000000e+00> : vector<2x1xf32>
    %682 = vector.multi_reduction <add>, %681, %cst_233 [1] : vector<2x8x1xf32> to vector<2x1xf32>
    %683 = vector.shape_cast %682 : vector<2x1xf32> to vector<2x1x1xf32>
    %684 = tpu.bitcast %669 : vector<2x1x1xi32> -> vector<2x1x1xf32>
    %685 = arith.subf %203, %678 : vector<2x1x1xf32>
    %cst_234 = arith.constant 0.000000e+00 : f32
    %686 = vector.broadcast %cst_234 : f32 to vector<2x1x1xf32>
    %687 = arith.maximumf %685, %686 : vector<2x1x1xf32>
    %688 = arith.mulf %687, %684 : vector<2x1x1xf32>
    %689 = arith.addf %683, %688 : vector<2x1x1xf32>
    %cst_235 = arith.constant 0.000000e+00 : f32
    %690 = vector.broadcast %cst_235 : f32 to vector<2x1x1xf32>
    %691 = arith.cmpf ogt, %203, %690 : vector<2x1x1xf32>
    %cst_236 = arith.constant 0.000000e+00 : f32
    %692 = vector.broadcast %cst_236 : f32 to vector<2x1x1xf32>
    %693 = arith.select %691, %689, %692 : vector<2x1x1xi1>, vector<2x1x1xf32>
    %694 = tpu.iota {dimensions = array<i32: 2>} : vector<2x1x128xi32>
    %c0_i32_237 = arith.constant 0 : i32
    %695 = vector.broadcast %c0_i32_237 : i32 to vector<2x1x128xi32>
    %696 = arith.cmpi eq, %694, %695 : vector<2x1x128xi32>
    %c1_i32_238 = arith.constant 1 : i32
    %697 = vector.broadcast %c1_i32_238 : i32 to vector<2x1x128xi32>
    %698 = arith.cmpi eq, %694, %697 : vector<2x1x128xi32>
    %699 = arith.addf %198, %693 : vector<2x1x1xf32>
    %c2_i32_239 = arith.constant 2 : i32
    %700 = vector.broadcast %c2_i32_239 : i32 to vector<2x1x128xi32>
    %701 = arith.cmpi eq, %694, %700 : vector<2x1x128xi32>
    %cst_240 = arith.constant 0.000000e+00 : f32
    %702 = vector.shape_cast %8 : vector<2x1x1xf32> to vector<2x1x1xf32>
    %703 = vector.broadcast %702 : vector<2x1x1xf32> to vector<2x1x128xf32>
    %704 = vector.broadcast %cst_240 : f32 to vector<2x1x128xf32>
    %705 = arith.select %701, %703, %704 : vector<2x1x128xi1>, vector<2x1x128xf32>
    %706 = vector.shape_cast %699 : vector<2x1x1xf32> to vector<2x1x1xf32>
    %707 = vector.broadcast %706 : vector<2x1x1xf32> to vector<2x1x128xf32>
    %708 = arith.select %698, %707, %705 : vector<2x1x128xi1>, vector<2x1x128xf32>
    %709 = vector.shape_cast %74 : vector<2x1x1xf32> to vector<2x1x1xf32>
    %710 = vector.broadcast %709 : vector<2x1x1xf32> to vector<2x1x128xf32>
    %711 = arith.select %696, %710, %708 : vector<2x1x128xi1>, vector<2x1x128xf32>
    %c0_241 = arith.constant 0 : index
    %c0_242 = arith.constant 0 : index
    %c0_243 = arith.constant 0 : index
    %712 = vector.load %arg5[%c0_241, %c0_242, %c0_243] : memref<2x1x128xf32, #tpu.memory_space<vmem>>, vector<2x1x128xf32>
    tpu.vector_store %arg5[%c0_241, %c0_242, %c0_243], %711 {strides = array<i32>} : memref<2x1x128xf32, #tpu.memory_space<vmem>>, vector<2x1x128xf32>,
    return
  }
  func.func @transform_0(%arg0: i32) -> (i32, i32, i32, i32) {
    %c0_i32 = arith.constant 0 : i32
    %c0_i32_0 = arith.constant 0 : i32
    %c0_i32_1 = arith.constant 0 : i32
    %c0_i32_2 = arith.constant 0 : i32
    return %arg0, %c0_i32, %c0_i32_0, %c0_i32_1 : i32, i32, i32, i32
  }
  func.func @transform_1(%arg0: i32) -> (i32, i32, i32, i32) {
    %c0_i32 = arith.constant 0 : i32
    %c0_i32_0 = arith.constant 0 : i32
    %c0_i32_1 = arith.constant 0 : i32
    %c0_i32_2 = arith.constant 0 : i32
    return %arg0, %c0_i32, %c0_i32_0, %c0_i32_1 : i32, i32, i32, i32
  }
  func.func @transform_2(%arg0: i32) -> (i32, i32, i32, i32) {
    %c0_i32 = arith.constant 0 : i32
    %c0_i32_0 = arith.constant 0 : i32
    %c0_i32_1 = arith.constant 0 : i32
    %c0_i32_2 = arith.constant 0 : i32
    return %arg0, %c0_i32, %c0_i32_0, %c0_i32_1 : i32, i32, i32, i32
  }
  func.func @transform_3(%arg0: i32) -> (i32, i32, i32) {
    %c0_i32 = arith.constant 0 : i32
    %c0_i32_0 = arith.constant 0 : i32
    %c0_i32_1 = arith.constant 0 : i32
    return %arg0, %c0_i32, %c0_i32_0 : i32, i32, i32
  }
  func.func @transform_4(%arg0: i32) -> (i32, i32, i32) {
    %c0_i32 = arith.constant 0 : i32
    %c0_i32_0 = arith.constant 0 : i32
    %c0_i32_1 = arith.constant 0 : i32
    return %arg0, %c0_i32, %c0_i32_0 : i32, i32, i32
  }
}

</mosaic_0001>

<llo_original>
// kernel: ssd_loss_neg_weights.1
$region0: #{ssd_loss_neg_weights.1}
  #allocation0 [shape = 'u32[]', space=smem, size = 0x4, offset = 0x4, fixed_abs, tag = 'smem constant byte address 0x4 - core index']
  #allocation1 [shape = 'u32[144,128]{1,0:T(1,128)}', space=vmem, size = 0x12000, scoped, tag = 'internal scratch']
  %s0 = inlined_call_operand.vmem [shape: f32[2,4,8,128], index: 0, kind: input, shape index: {}]
  %s1 = inlined_call_operand.vmem [shape: f32[2,4,8,128], index: 1, kind: input, shape index: {}]
  %s2 = inlined_call_operand.vmem [shape: f32[2,8,8,128], index: 2, kind: input, shape index: {}]
  %s3 = inlined_call_operand.vmem [shape: s32[2,8,128], index: 3, kind: input, shape index: {}]
  %s4 = inlined_call_operand.vmem [shape: f32[2,1,128], index: 4, kind: output, shape index: {}]
  %s5 = sld [smem:[#allocation0]]
  $region26: #{ssd_loss_neg_weights.1} parent=0
    _
  %s7 = ssub.s32 1, %s5
  %s8 = scalar_select 0, %s7, %s5
  // Predicated region
  $region2: #{ssd_loss_neg_weights.1} parent=0 // pred_check
    _
  $region3: #{ssd_loss_neg_weights.1} parent=0 // pred_check_branch
    %10 = sbr.rel (0) target = $region5
  $region4: #{ssd_loss_neg_weights.1} parent=0 // pred_region
    _
  $region5: #{ssd_loss_neg_weights.1} parent=0 // pred_fallthru
    _
  // Predicated region
  $region6: #{ssd_loss_neg_weights.1} parent=0 // pred_check
    _
  $region7: #{ssd_loss_neg_weights.1} parent=0 // pred_check_branch
    %12 = sbr.rel (0) target = $region9
  $region8: #{ssd_loss_neg_weights.1} parent=0 // pred_region
    _
  $region9: #{ssd_loss_neg_weights.1} parent=0 // pred_fallthru
    _
  // Predicated region
  $region10: #{ssd_loss_neg_weights.1} parent=0 // pred_check
    _
  $region11: #{ssd_loss_neg_weights.1} parent=0 // pred_check_branch
    %14 = sbr.rel (0) target = $region13
  $region12: #{ssd_loss_neg_weights.1} parent=0 // pred_region
    _
  $region13: #{ssd_loss_neg_weights.1} parent=0 // pred_fallthru
    _
  // Predicated region
  $region14: #{ssd_loss_neg_weights.1} parent=0 // pred_check
    _
  $region15: #{ssd_loss_neg_weights.1} parent=0 // pred_check_branch
    %16 = sbr.rel (0) target = $region17
  $region16: #{ssd_loss_neg_weights.1} parent=0 // pred_region
    _
  $region17: #{ssd_loss_neg_weights.1} parent=0 // pred_fallthru
    _
  %v17 = vld [vmem:[%s3] sm:$0xff]
  %v18 = vld [vmem:[%s3 + $0x8] sm:$0xff]
  %vm19 = vcmp.gt.s32.totalorder %v17, 0
  %vm20 = vcmp.gt.s32.totalorder %v18, 0
  %v21 = vsel %vm19, 1, 0
  %v22 = vsel %vm20, 1, 0
  %v23 = vcvt.s32.f32 %v21
  %v24 = vcvt.s32.f32 %v22
  %25 = vadd.xlane.f32.xlu0 %v23
  %v26 = vpop.xlane.xlu0 %25
  %27 = vadd.xlane.f32.xlu0 %v24
  %v28 = vpop.xlane.xlu0 %27
  %v29 = vrot.slane %v26, 4
  %v30 = vadd.f32 %v26, %v29
  %v31 = vrot.slane %v30, 2
  %v32 = vadd.f32 %v30, %v31
  %v33 = vrot.slane %v32, 1
  %v34 = vadd.f32 %v32, %v33
  %v35 = vrot.slane %v28, 4
  %v36 = vadd.f32 %v28, %v35
  %v37 = vrot.slane %v36, 2
  %v38 = vadd.f32 %v36, %v37
  %v39 = vrot.slane %v38, 1
  %v40 = vadd.f32 %v38, %v39
  %v41 = vld [vmem:[%s0] sm:$0xff]
  %v42 = vld [vmem:[%s0 + $0x20] sm:$0xff]
  %v43 = vld [vmem:[%s1] sm:$0xff]
  %v44 = vld [vmem:[%s1 + $0x20] sm:$0xff]
  %v45 = vsub.f32 %v41, %v43
  %v46 = vsub.f32 %v42, %v44
  %v47 = vand.u32 2147483647, %v45
  %v48 = vand.u32 2147483647, %v46
  %vm49 = vcmp.lt.f32.partialorder %v47, 1.0
  %vm50 = vcmp.lt.f32.partialorder %v48, 1.0
  %v51 = vmul.f32 %v45, 0.5
  %v52 = vmul.f32 %v46, 0.5
  %v53 = vmul.f32 %v51, %v45
  %v54 = vmul.f32 %v52, %v46
  %v55 = vsub.f32 %v47, 0.5
  %v56 = vsub.f32 %v48, 0.5
  %v57 = vsel %vm49, %v53, %v55
  %v58 = vsel %vm50, %v54, %v56
  %v59 = vadd.f32 %v57, 0.0
  %v60 = vadd.f32 %v58, 0.0
  %s61 = scalar_lea.vmem %s0, 8
  %v62 = vld [vmem:[%s61] sm:$0xff]
  %v63 = vld [vmem:[%s61 + $0x20] sm:$0xff]
  %s64 = scalar_lea.vmem %s1, 8
  %v65 = vld [vmem:[%s64] sm:$0xff]
  %v66 = vld [vmem:[%s64 + $0x20] sm:$0xff]
  %v67 = vsub.f32 %v62, %v65
  %v68 = vsub.f32 %v63, %v66
  %v69 = vand.u32 2147483647, %v67
  %v70 = vand.u32 2147483647, %v68
  %vm71 = vcmp.lt.f32.partialorder %v69, 1.0
  %vm72 = vcmp.lt.f32.partialorder %v70, 1.0
  %v73 = vmul.f32 %v67, 0.5
  %v74 = vmul.f32 %v68, 0.5
  %v75 = vmul.f32 %v73, %v67
  %v76 = vmul.f32 %v74, %v68
  %v77 = vsub.f32 %v69, 0.5
  %v78 = vsub.f32 %v70, 0.5
  %v79 = vsel %vm71, %v75, %v77
  %v80 = vsel %vm72, %v76, %v78
  %v81 = vadd.f32 %v59, %v79
  %v82 = vadd.f32 %v60, %v80
  %s83 = scalar_lea.vmem %s0, 16
  %v84 = vld [vmem:[%s83] sm:$0xff]
  %v85 = vld [vmem:[%s83 + $0x20] sm:$0xff]
  %s86 = scalar_lea.vmem %s1, 16
  %v87 = vld [vmem:[%s86] sm:$0xff]
  %v88 = vld [vmem:[%s86 + $0x20] sm:$0xff]
  %v89 = vsub.f32 %v84, %v87
  %v90 = vsub.f32 %v85, %v88
  %v91 = vand.u32 2147483647, %v89
  %v92 = vand.u32 2147483647, %v90
  %vm93 = vcmp.lt.f32.partialorder %v91, 1.0
  %vm94 = vcmp.lt.f32.partialorder %v92, 1.0
  %v95 = vmul.f32 %v89, 0.5
  %v96 = vmul.f32 %v90, 0.5
  %v97 = vmul.f32 %v95, %v89
  %v98 = vmul.f32 %v96, %v90
  %v99 = vsub.f32 %v91, 0.5
  %v100 = vsub.f32 %v92, 0.5
  %v101 = vsel %vm93, %v97, %v99
  %v102 = vsel %vm94, %v98, %v100
  %v103 = vadd.f32 %v81, %v101
  %v104 = vadd.f32 %v82, %v102
  %s105 = scalar_lea.vmem %s0, 24
  %v106 = vld [vmem:[%s105] sm:$0xff]
  %v107 = vld [vmem:[%s105 + $0x20] sm:$0xff]
  %s108 = scalar_lea.vmem %s1, 24
  %v109 = vld [vmem:[%s108] sm:$0xff]
  %v110 = vld [vmem:[%s108 + $0x20] sm:$0xff]
  %v111 = vsub.f32 %v106, %v109
  %v112 = vsub.f32 %v107, %v110
  %v113 = vand.u32 2147483647, %v111
  %v114 = vand.u32 2147483647, %v112
  %vm115 = vcmp.lt.f32.partialorder %v113, 1.0
  %vm116 = vcmp.lt.f32.partialorder %v114, 1.0
  %v117 = vmul.f32 %v111, 0.5
  %v118 = vmul.f32 %v112, 0.5
  %v119 = vmul.f32 %v117, %v111
  %v120 = vmul.f32 %v118, %v112
  %v121 = vsub.f32 %v113, 0.5
  %v122 = vsub.f32 %v114, 0.5
  %v123 = vsel %vm115, %v119, %v121
  %v124 = vsel %vm116, %v120, %v122
  %v125 = vadd.f32 %v103, %v123
  %v126 = vadd.f32 %v104, %v124
  %v127 = vmul.f32 %v125, %v23
  %v128 = vmul.f32 %v126, %v24
  %129 = vadd.xlane.f32.xlu0 %v127
  %v130 = vpop.xlane.xlu0 %129
  %131 = vadd.xlane.f32.xlu0 %v128
  %v132 = vpop.xlane.xlu0 %131
  %v133 = vrot.slane %v130, 4
  %v134 = vadd.f32 %v130, %v133
  %v135 = vrot.slane %v134, 2
  %v136 = vadd.f32 %v134, %v135
  %v137 = vrot.slane %v136, 1
  %v138 = vadd.f32 %v136, %v137
  %v139 = vrot.slane %v132, 4
  %v140 = vadd.f32 %v132, %v139
  %v141 = vrot.slane %v140, 2
  %v142 = vadd.f32 %v140, %v141
  %v143 = vrot.slane %v142, 1
  %v144 = vadd.f32 %v142, %v143
  %vm145 = vcmp.gt.s32.totalorder %v17, 0
  %v146 = vsel %vm145, %v17, 0
  %vm147 = vcmp.gt.s32.totalorder %v18, 0
  %v148 = vsel %vm147, %v18, 0
  %v149 = vld [vmem:[%s2] sm:$0xff]
  %v150 = vld [vmem:[%s2 + $0x40] sm:$0xff]
  %s151 = scalar_lea.vmem %s2, 8
  %v152 = vld [vmem:[%s151] sm:$0xff]
  %v153 = vld [vmem:[%s151 + $0x40] sm:$0xff]
  %v154 = vmax.f32 %v149, %v152
  %v155 = vmax.f32 %v150, %v153
  %s156 = scalar_lea.vmem %s2, 16
  %v157 = vld [vmem:[%s156] sm:$0xff]
  %v158 = vld [vmem:[%s156 + $0x40] sm:$0xff]
  %v159 = vmax.f32 %v154, %v157
  %v160 = vmax.f32 %v155, %v158
  %s161 = scalar_lea.vmem %s2, 24
  %v162 = vld [vmem:[%s161] sm:$0xff]
  %v163 = vld [vmem:[%s161 + $0x40] sm:$0xff]
  %v164 = vmax.f32 %v159, %v162
  %v165 = vmax.f32 %v160, %v163
  %s166 = scalar_lea.vmem %s2, 32
  %v167 = vld [vmem:[%s166] sm:$0xff]
  %v168 = vld [vmem:[%s166 + $0x40] sm:$0xff]
  %v169 = vmax.f32 %v164, %v167
  %v170 = vmax.f32 %v165, %v168
  %s171 = scalar_lea.vmem %s2, 40
  %v172 = vld [vmem:[%s171] sm:$0xff]
  %v173 = vld [vmem:[%s171 + $0x40] sm:$0xff]
  %v174 = vmax.f32 %v169, %v172
  %v175 = vmax.f32 %v170, %v173
  %s176 = scalar_lea.vmem %s2, 48
  %v177 = vld [vmem:[%s176] sm:$0xff]
  %v178 = vld [vmem:[%s176 + $0x40] sm:$0xff]
  %v179 = vmax.f32 %v174, %v177
  %v180 = vmax.f32 %v175, %v178
  %s181 = scalar_lea.vmem %s2, 56
  %v182 = vld [vmem:[%s181] sm:$0xff]
  %v183 = vld [vmem:[%s181 + $0x40] sm:$0xff]
  %v184 = vmax.f32 %v179, %v182
  %v185 = vmax.f32 %v180, %v183
  %v186 = vsub.f32 %v149, %v184
  %v187 = vsub.f32 %v150, %v185
  %v188 = vmul.f32 %v186, 1.442695
  %v189 = vpow.pop %v188
  %v190 = vmul.f32 %v187, 1.442695
  %v191 = vpow.pop %v190
  %v192 = vadd.f32 %v189, 0.0
  %v193 = vadd.f32 %v191, 0.0
  %vm194 = vcmp.eq.s32.totalorder %v146, 0
  %vm195 = vcmp.eq.s32.totalorder %v148, 0
  %v196 = vsel %vm194, %v186, 0.0
  %v197 = vsel %vm195, %v187, 0.0
  %v198 = vadd.f32 %v196, 0.0
  %v199 = vadd.f32 %v197, 0.0
  %v200 = vsub.f32 %v152, %v184
  %v201 = vsub.f32 %v153, %v185
  %v202 = vmul.f32 %v200, 1.442695
  %v203 = vpow.pop %v202
  %v204 = vmul.f32 %v201, 1.442695
  %v205 = vpow.pop %v204
  %v206 = vadd.f32 %v192, %v203
  %v207 = vadd.f32 %v193, %v205
  %vm208 = vcmp.eq.s32.totalorder %v146, 1
  %vm209 = vcmp.eq.s32.totalorder %v148, 1
  %v210 = vsel %vm208, %v200, 0.0
  %v211 = vsel %vm209, %v201, 0.0
  %v212 = vadd.f32 %v198, %v210
  %v213 = vadd.f32 %v199, %v211
  %v214 = vsub.f32 %v157, %v184
  %v215 = vsub.f32 %v158, %v185
  %v216 = vmul.f32 %v214, 1.442695
  %v217 = vpow.pop %v216
  %v218 = vmul.f32 %v215, 1.442695
  %v219 = vpow.pop %v218
  %v220 = vadd.f32 %v206, %v217
  %v221 = vadd.f32 %v207, %v219
  %vm222 = vcmp.eq.s32.totalorder %v146, 2
  %vm223 = vcmp.eq.s32.totalorder %v148, 2
  %v224 = vsel %vm222, %v214, 0.0
  %v225 = vsel %vm223, %v215, 0.0
  %v226 = vadd.f32 %v212, %v224
  %v227 = vadd.f32 %v213, %v225
  %v228 = vsub.f32 %v162, %v184
  %v229 = vsub.f32 %v163, %v185
  %v230 = vmul.f32 %v228, 1.442695
  %v231 = vpow.pop %v230
  %v232 = vmul.f32 %v229, 1.442695
  %v233 = vpow.pop %v232
  %v234 = vadd.f32 %v220, %v231
  %v235 = vadd.f32 %v221, %v233
  %vm236 = vcmp.eq.s32.totalorder %v146, 3
  %vm237 = vcmp.eq.s32.totalorder %v148, 3
  %v238 = vsel %vm236, %v228, 0.0
  %v239 = vsel %vm237, %v229, 0.0
  %v240 = vadd.f32 %v226, %v238
  %v241 = vadd.f32 %v227, %v239
  %v242 = vsub.f32 %v167, %v184
  %v243 = vsub.f32 %v168, %v185
  %v244 = vmul.f32 %v242, 1.442695
  %v245 = vpow.pop %v244
  %v246 = vmul.f32 %v243, 1.442695
  %v247 = vpow.pop %v246
  %v248 = vadd.f32 %v234, %v245
  %v249 = vadd.f32 %v235, %v247
  %vm250 = vcmp.eq.s32.totalorder %v146, 4
  %vm251 = vcmp.eq.s32.totalorder %v148, 4
  %v252 = vsel %vm250, %v242, 0.0
  %v253 = vsel %vm251, %v243, 0.0
  %v254 = vadd.f32 %v240, %v252
  %v255 = vadd.f32 %v241, %v253
  %v256 = vsub.f32 %v172, %v184
  %v257 = vsub.f32 %v173, %v185
  %v258 = vmul.f32 %v256, 1.442695
  %v259 = vpow.pop %v258
  %v260 = vmul.f32 %v257, 1.442695
  %v261 = vpow.pop %v260
  %v262 = vadd.f32 %v248, %v259
  %v263 = vadd.f32 %v249, %v261
  %vm264 = vcmp.eq.s32.totalorder %v146, 5
  %vm265 = vcmp.eq.s32.totalorder %v148, 5
  %v266 = vsel %vm264, %v256, 0.0
  %v267 = vsel %vm265, %v257, 0.0
  %v268 = vadd.f32 %v254, %v266
  %v269 = vadd.f32 %v255, %v267
  %v270 = vsub.f32 %v177, %v184
  %v271 = vsub.f32 %v178, %v185
  %v272 = vmul.f32 %v270, 1.442695
  %v273 = vpow.pop %v272
  %v274 = vmul.f32 %v271, 1.442695
  %v275 = vpow.pop %v274
  %v276 = vadd.f32 %v262, %v273
  %v277 = vadd.f32 %v263, %v275
  %vm278 = vcmp.eq.s32.totalorder %v146, 6
  %vm279 = vcmp.eq.s32.totalorder %v148, 6
  %v280 = vsel %vm278, %v270, 0.0
  %v281 = vsel %vm279, %v271, 0.0
  %v282 = vadd.f32 %v268, %v280
  %v283 = vadd.f32 %v269, %v281
  %v284 = vsub.f32 %v182, %v184
  %v285 = vsub.f32 %v183, %v185
  %v286 = vmul.f32 %v284, 1.442695
  %v287 = vpow.pop %v286
  %v288 = vmul.f32 %v285, 1.442695
  %v289 = vpow.pop %v288
  %v290 = vadd.f32 %v276, %v287
  %v291 = vadd.f32 %v277, %v289
  %vm292 = vcmp.eq.s32.totalorder %v146, 7
  %vm293 = vcmp.eq.s32.totalorder %v148, 7
  %v294 = vsel %vm292, %v284, 0.0
  %v295 = vsel %vm293, %v285, 0.0
  %v296 = vadd.f32 %v282, %v294
  %v297 = vadd.f32 %v283, %v295
  %v298 = vlog2.pop %v290
  %v299 = vmul.f32 %v298, 0.6931472
  %v300 = vlog2.pop %v291
  %v301 = vmul.f32 %v300, 0.6931472
  %v302 = vsel %vm194, 0.5, 1.0
  %v303 = vsel %vm195, 0.5, 1.0
  %v304 = vsub.f32 %v299, %v296
  %v305 = vsub.f32 %v301, %v297
  %v306 = vmul.f32 %v302, %v304
  %v307 = vmul.f32 %v303, %v305
  %vm308 = vcmp.lt.s32.totalorder %v17, 0
  %vm309 = vcmp.lt.s32.totalorder %v18, 0
  %v310 = vsel %vm308, 0.0, %v306
  %v311 = vsel %vm309, 0.0, %v307
  %v312 = vmul.f32 %v310, %v23
  %v313 = vmul.f32 %v311, %v24
  %314 = vadd.xlane.f32.xlu0 %v312
  %v315 = vpop.xlane.xlu0 %314
  %316 = vadd.xlane.f32.xlu0 %v313
  %v317 = vpop.xlane.xlu0 %316
  %v318 = vrot.slane %v315, 4
  %v319 = vadd.f32 %v315, %v318
  %v320 = vrot.slane %v319, 2
  %v321 = vadd.f32 %v319, %v320
  %v322 = vrot.slane %v321, 1
  %v323 = vadd.f32 %v321, %v322
  %v324 = vrot.slane %v317, 4
  %v325 = vadd.f32 %v317, %v324
  %v326 = vrot.slane %v325, 2
  %v327 = vadd.f32 %v325, %v326
  %v328 = vrot.slane %v327, 1
  %v329 = vadd.f32 %v327, %v328
  %v330 = vsel %vm19, 0.0, %v310
  %v331 = vsel %vm20, 0.0, %v311
  %v334 = vmul.f32 %v34, 3.0
  %v335 = vmul.f32 %v40, 3.0
  %vm336 = vcmp.ge.s32.totalorder %v330, 1069547520
  %vm337 = vcmp.ge.s32.totalorder %v331, 1069547520
  %v338 = vsel %vm336, 1, 0
  %v339 = vsel %vm337, 1, 0
  %v340 = vcvt.s32.f32 %v338
  %v341 = vcvt.s32.f32 %v339
  %342 = vadd.xlane.f32.xlu0 %v340
  %v343 = vpop.xlane.xlu0 %342
  %344 = vadd.xlane.f32.xlu0 %v341
  %v345 = vpop.xlane.xlu0 %344
  %v346 = vrot.slane %v343, 4
  %v347 = vadd.f32 %v343, %v346
  %v348 = vrot.slane %v347, 2
  %v349 = vadd.f32 %v347, %v348
  %v350 = vrot.slane %v349, 1
  %v351 = vadd.f32 %v349, %v350
  %v352 = vrot.slane %v345, 4
  %v353 = vadd.f32 %v345, %v352
  %v354 = vrot.slane %v353, 2
  %v355 = vadd.f32 %v353, %v354
  %v356 = vrot.slane %v355, 1
  %v357 = vadd.f32 %v355, %v356
  %vm358 = vcmp.ge.f32.partialorder %v351, %v334
  %vm359 = vcmp.ge.f32.partialorder %v357, %v335
  %v360 = vsel %vm358, 1069547520, 0
  %v361 = vsel %vm359, 1069547520, 0
  %v362 = vsel %vm358, 2139095040, 1069547520
  %v363 = vsel %vm359, 2139095040, 1069547520
  %v364 = vsub.s32 %v362, %v360
  %v365 = vsub.s32 %v363, %v361
  %v366 = vshra.s32 %v364, 1
  %v367 = vshra.s32 %v365, 1
  %v368 = vadd.s32 %v360, %v366
  %v369 = vadd.s32 %v361, %v367
  %vm370 = vcmp.ge.s32.totalorder %v330, %v368
  %vm371 = vcmp.ge.s32.totalorder %v331, %v369
  %v372 = vsel %vm370, 1, 0
  %v373 = vsel %vm371, 1, 0
  %v374 = vcvt.s32.f32 %v372
  %v375 = vcvt.s32.f32 %v373
  %376 = vadd.xlane.f32.xlu0 %v374
  %v377 = vpop.xlane.xlu0 %376
  %378 = vadd.xlane.f32.xlu0 %v375
  %v379 = vpop.xlane.xlu0 %378
  %v380 = vrot.slane %v377, 4
  %v381 = vadd.f32 %v377, %v380
  %v382 = vrot.slane %v381, 2
  %v383 = vadd.f32 %v381, %v382
  %v384 = vrot.slane %v383, 1
  %v385 = vadd.f32 %v383, %v384
  %v386 = vrot.slane %v379, 4
  %v387 = vadd.f32 %v379, %v386
  %v388 = vrot.slane %v387, 2
  %v389 = vadd.f32 %v387, %v388
  %v390 = vrot.slane %v389, 1
  %v391 = vadd.f32 %v389, %v390
  %vm392 = vcmp.ge.f32.partialorder %v385, %v334
  %vm393 = vcmp.ge.f32.partialorder %v391, %v335
  %v394 = vsel %vm392, %v368, %v360
  %v395 = vsel %vm393, %v369, %v361
  %v396 = vsel %vm392, %v362, %v368
  %v397 = vsel %vm393, %v363, %v369
  %v398 = vsub.s32 %v396, %v394
  %v399 = vsub.s32 %v397, %v395
  %v400 = vshra.s32 %v398, 1
  %v401 = vshra.s32 %v399, 1
  %v402 = vadd.s32 %v394, %v400
  %v403 = vadd.s32 %v395, %v401
  %vm404 = vcmp.ge.s32.totalorder %v330, %v402
  %vm405 = vcmp.ge.s32.totalorder %v331, %v403
  %v406 = vsel %vm404, 1, 0
  %v407 = vsel %vm405, 1, 0
  %v408 = vcvt.s32.f32 %v406
  %v409 = vcvt.s32.f32 %v407
  %410 = vadd.xlane.f32.xlu0 %v408
  %v411 = vpop.xlane.xlu0 %410
  %412 = vadd.xlane.f32.xlu0 %v409
  %v413 = vpop.xlane.xlu0 %412
  %v414 = vrot.slane %v411, 4
  %v415 = vadd.f32 %v411, %v414
  %v416 = vrot.slane %v415, 2
  %v417 = vadd.f32 %v415, %v416
  %v418 = vrot.slane %v417, 1
  %v419 = vadd.f32 %v417, %v418
  %v420 = vrot.slane %v413, 4
  %v421 = vadd.f32 %v413, %v420
  %v422 = vrot.slane %v421, 2
  %v423 = vadd.f32 %v421, %v422
  %v424 = vrot.slane %v423, 1
  %v425 = vadd.f32 %v423, %v424
  %vm426 = vcmp.ge.f32.partialorder %v419, %v334
  %vm427 = vcmp.ge.f32.partialorder %v425, %v335
  %v428 = vsel %vm426, %v402, %v394
  %v429 = vsel %vm427, %v403, %v395
  %v430 = vsel %vm426, %v396, %v402
  %v431 = vsel %vm427, %v397, %v403
  %v432 = vsub.s32 %v430, %v428
  %v433 = vsub.s32 %v431, %v429
  %v434 = vshra.s32 %v432, 1
  %v435 = vshra.s32 %v433, 1
  %v436 = vadd.s32 %v428, %v434
  %v437 = vadd.s32 %v429, %v435
  %vm438 = vcmp.ge.s32.totalorder %v330, %v436
  %vm439 = vcmp.ge.s32.totalorder %v331, %v437
  %v440 = vsel %vm438, 1, 0
  %v441 = vsel %vm439, 1, 0
  %v442 = vcvt.s32.f32 %v440
  %v443 = vcvt.s32.f32 %v441
  %444 = vadd.xlane.f32.xlu0 %v442
  %v445 = vpop.xlane.xlu0 %444
  %446 = vadd.xlane.f32.xlu0 %v443
  %v447 = vpop.xlane.xlu0 %446
  %v448 = vrot.slane %v445, 4
  %v449 = vadd.f32 %v445, %v448
  %v450 = vrot.slane %v449, 2
  %v451 = vadd.f32 %v449, %v450
  %v452 = vrot.slane %v451, 1
  %v453 = vadd.f32 %v451, %v452
  %v454 = vrot.slane %v447, 4
  %v455 = vadd.f32 %v447, %v454
  %v456 = vrot.slane %v455, 2
  %v457 = vadd.f32 %v455, %v456
  %v458 = vrot.slane %v457, 1
  %v459 = vadd.f32 %v457, %v458
  %vm460 = vcmp.ge.f32.partialorder %v453, %v334
  %vm461 = vcmp.ge.f32.partialorder %v459, %v335
  %v462 = vsel %vm460, %v436, %v428
  %v463 = vsel %vm461, %v437, %v429
  %v464 = vsel %vm460, %v430, %v436
  %v465 = vsel %vm461, %v431, %v437
  %v466 = vsub.s32 %v464, %v462
  %v467 = vsub.s32 %v465, %v463
  %v468 = vshra.s32 %v466, 1
  %v469 = vshra.s32 %v467, 1
  %v470 = vadd.s32 %v462, %v468
  %v471 = vadd.s32 %v463, %v469
  %vm472 = vcmp.ge.s32.totalorder %v330, %v470
  %vm473 = vcmp.ge.s32.totalorder %v331, %v471
  %v474 = vsel %vm472, 1, 0
  %v475 = vsel %vm473, 1, 0
  %v476 = vcvt.s32.f32 %v474
  %v477 = vcvt.s32.f32 %v475
  %478 = vadd.xlane.f32.xlu0 %v476
  %v479 = vpop.xlane.xlu0 %478
  %480 = vadd.xlane.f32.xlu0 %v477
  %v481 = vpop.xlane.xlu0 %480
  %v482 = vrot.slane %v479, 4
  %v483 = vadd.f32 %v479, %v482
  %v484 = vrot.slane %v483, 2
  %v485 = vadd.f32 %v483, %v484
  %v486 = vrot.slane %v485, 1
  %v487 = vadd.f32 %v485, %v486
  %v488 = vrot.slane %v481, 4
  %v489 = vadd.f32 %v481, %v488
  %v490 = vrot.slane %v489, 2
  %v491 = vadd.f32 %v489, %v490
  %v492 = vrot.slane %v491, 1
  %v493 = vadd.f32 %v491, %v492
  %vm494 = vcmp.ge.f32.partialorder %v487, %v334
  %vm495 = vcmp.ge.f32.partialorder %v493, %v335
  %v496 = vsel %vm494, %v470, %v462
  %v497 = vsel %vm495, %v471, %v463
  %v498 = vsel %vm494, %v464, %v470
  %v499 = vsel %vm495, %v465, %v471
  %v500 = vsub.s32 %v498, %v496
  %v501 = vsub.s32 %v499, %v497
  %v502 = vshra.s32 %v500, 1
  %v503 = vshra.s32 %v501, 1
  %v504 = vadd.s32 %v496, %v502
  %v505 = vadd.s32 %v497, %v503
  %vm506 = vcmp.ge.s32.totalorder %v330, %v504
  %vm507 = vcmp.ge.s32.totalorder %v331, %v505
  %v508 = vsel %vm506, 1, 0
  %v509 = vsel %vm507, 1, 0
  %v510 = vcvt.s32.f32 %v508
  %v511 = vcvt.s32.f32 %v509
  %512 = vadd.xlane.f32.xlu0 %v510
  %v513 = vpop.xlane.xlu0 %512
  %514 = vadd.xlane.f32.xlu0 %v511
  %v515 = vpop.xlane.xlu0 %514
  %v516 = vrot.slane %v513, 4
  %v517 = vadd.f32 %v513, %v516
  %v518 = vrot.slane %v517, 2
  %v519 = vadd.f32 %v517, %v518
  %v520 = vrot.slane %v519, 1
  %v521 = vadd.f32 %v519, %v520
  %v522 = vrot.slane %v515, 4
  %v523 = vadd.f32 %v515, %v522
  %v524 = vrot.slane %v523, 2
  %v525 = vadd.f32 %v523, %v524
  %v526 = vrot.slane %v525, 1
  %v527 = vadd.f32 %v525, %v526
  %vm528 = vcmp.ge.f32.partialorder %v521, %v334
  %vm529 = vcmp.ge.f32.partialorder %v527, %v335
  %v530 = vsel %vm528, %v504, %v496
  %v531 = vsel %vm529, %v505, %v497
  %v532 = vsel %vm528, %v498, %v504
  %v533 = vsel %vm529, %v499, %v505
  %v534 = vsub.s32 %v532, %v530
  %v535 = vsub.s32 %v533, %v531
  %v536 = vshra.s32 %v534, 1
  %v537 = vshra.s32 %v535, 1
  %v538 = vadd.s32 %v530, %v536
  %v539 = vadd.s32 %v531, %v537
  %vm540 = vcmp.ge.s32.totalorder %v330, %v538
  %vm541 = vcmp.ge.s32.totalorder %v331, %v539
  %v542 = vsel %vm540, 1, 0
  %v543 = vsel %vm541, 1, 0
  %v544 = vcvt.s32.f32 %v542
  %v545 = vcvt.s32.f32 %v543
  %546 = vadd.xlane.f32.xlu0 %v544
  %v547 = vpop.xlane.xlu0 %546
  %548 = vadd.xlane.f32.xlu0 %v545
  %v549 = vpop.xlane.xlu0 %548
  %v550 = vrot.slane %v547, 4
  %v551 = vadd.f32 %v547, %v550
  %v552 = vrot.slane %v551, 2
  %v553 = vadd.f32 %v551, %v552
  %v554 = vrot.slane %v553, 1
  %v555 = vadd.f32 %v553, %v554
  %v556 = vrot.slane %v549, 4
  %v557 = vadd.f32 %v549, %v556
  %v558 = vrot.slane %v557, 2
  %v559 = vadd.f32 %v557, %v558
  %v560 = vrot.slane %v559, 1
  %v561 = vadd.f32 %v559, %v560
  %vm562 = vcmp.ge.f32.partialorder %v555, %v334
  %vm563 = vcmp.ge.f32.partialorder %v561, %v335
  %v564 = vsel %vm562, %v538, %v530
  %v565 = vsel %vm563, %v539, %v531
  %v566 = vsel %vm562, %v532, %v538
  %v567 = vsel %vm563, %v533, %v539
  %v568 = vsub.s32 %v566, %v564
  %v569 = vsub.s32 %v567, %v565
  %v570 = vshra.s32 %v568, 1
  %v571 = vshra.s32 %v569, 1
  %v572 = vadd.s32 %v564, %v570
  %v573 = vadd.s32 %v565, %v571
  %vm574 = vcmp.ge.s32.totalorder %v330, %v572
  %vm575 = vcmp.ge.s32.totalorder %v331, %v573
  %v576 = vsel %vm574, 1, 0
  %v577 = vsel %vm575, 1, 0
  %v578 = vcvt.s32.f32 %v576
  %v579 = vcvt.s32.f32 %v577
  %580 = vadd.xlane.f32.xlu0 %v578
  %v581 = vpop.xlane.xlu0 %580
  %582 = vadd.xlane.f32.xlu0 %v579
  %v583 = vpop.xlane.xlu0 %582
  %v584 = vrot.slane %v581, 4
  %v585 = vadd.f32 %v581, %v584
  %v586 = vrot.slane %v585, 2
  %v587 = vadd.f32 %v585, %v586
  %v588 = vrot.slane %v587, 1
  %v589 = vadd.f32 %v587, %v588
  %v590 = vrot.slane %v583, 4
  %v591 = vadd.f32 %v583, %v590
  %v592 = vrot.slane %v591, 2
  %v593 = vadd.f32 %v591, %v592
  %v594 = vrot.slane %v593, 1
  %v595 = vadd.f32 %v593, %v594
  %vm596 = vcmp.ge.f32.partialorder %v589, %v334
  %vm597 = vcmp.ge.f32.partialorder %v595, %v335
  %v598 = vsel %vm596, %v572, %v564
  %v599 = vsel %vm597, %v573, %v565
  %v600 = vsel %vm596, %v566, %v572
  %v601 = vsel %vm597, %v567, %v573
  %v602 = vsub.s32 %v600, %v598
  %v603 = vsub.s32 %v601, %v599
  %v604 = vshra.s32 %v602, 1
  %v605 = vshra.s32 %v603, 1
  %v606 = vadd.s32 %v598, %v604
  %v607 = vadd.s32 %v599, %v605
  %vm608 = vcmp.ge.s32.totalorder %v330, %v606
  %vm609 = vcmp.ge.s32.totalorder %v331, %v607
  %v610 = vsel %vm608, 1, 0
  %v611 = vsel %vm609, 1, 0
  %v612 = vcvt.s32.f32 %v610
  %v613 = vcvt.s32.f32 %v611
  %614 = vadd.xlane.f32.xlu0 %v612
  %v615 = vpop.xlane.xlu0 %614
  %616 = vadd.xlane.f32.xlu0 %v613
  %v617 = vpop.xlane.xlu0 %616
  %v618 = vrot.slane %v615, 4
  %v619 = vadd.f32 %v615, %v618
  %v620 = vrot.slane %v619, 2
  %v621 = vadd.f32 %v619, %v620
  %v622 = vrot.slane %v621, 1
  %v623 = vadd.f32 %v621, %v622
  %v624 = vrot.slane %v617, 4
  %v625 = vadd.f32 %v617, %v624
  %v626 = vrot.slane %v625, 2
  %v627 = vadd.f32 %v625, %v626
  %v628 = vrot.slane %v627, 1
  %v629 = vadd.f32 %v627, %v628
  %vm630 = vcmp.ge.f32.partialorder %v623, %v334
  %vm631 = vcmp.ge.f32.partialorder %v629, %v335
  %v632 = vsel %vm630, %v606, %v598
  %v633 = vsel %vm631, %v607, %v599
  %v634 = vsel %vm630, %v600, %v606
  %v635 = vsel %vm631, %v601, %v607
  %v636 = vsub.s32 %v634, %v632
  %v637 = vsub.s32 %v635, %v633
  %v638 = vshra.s32 %v636, 1
  %v639 = vshra.s32 %v637, 1
  %v640 = vadd.s32 %v632, %v638
  %v641 = vadd.s32 %v633, %v639
  %vm642 = vcmp.ge.s32.totalorder %v330, %v640
  %vm643 = vcmp.ge.s32.totalorder %v331, %v641
  %v644 = vsel %vm642, 1, 0
  %v645 = vsel %vm643, 1, 0
  %v646 = vcvt.s32.f32 %v644
  %v647 = vcvt.s32.f32 %v645
  %648 = vadd.xlane.f32.xlu0 %v646
  %v649 = vpop.xlane.xlu0 %648
  %650 = vadd.xlane.f32.xlu0 %v647
  %v651 = vpop.xlane.xlu0 %650
  %v652 = vrot.slane %v649, 4
  %v653 = vadd.f32 %v649, %v652
  %v654 = vrot.slane %v653, 2
  %v655 = vadd.f32 %v653, %v654
  %v656 = vrot.slane %v655, 1
  %v657 = vadd.f32 %v655, %v656
  %v658 = vrot.slane %v651, 4
  %v659 = vadd.f32 %v651, %v658
  %v660 = vrot.slane %v659, 2
  %v661 = vadd.f32 %v659, %v660
  %v662 = vrot.slane %v661, 1
  %v663 = vadd.f32 %v661, %v662
  %vm664 = vcmp.ge.f32.partialorder %v657, %v334
  %vm665 = vcmp.ge.f32.partialorder %v663, %v335
  %v666 = vsel %vm664, %v640, %v632
  %v667 = vsel %vm665, %v641, %v633
  %v668 = vsel %vm664, %v634, %v640
  %v669 = vsel %vm665, %v635, %v641
  %v670 = vsub.s32 %v668, %v666
  %v671 = vsub.s32 %v669, %v667
  %v672 = vshra.s32 %v670, 1
  %v673 = vshra.s32 %v671, 1
  %v674 = vadd.s32 %v666, %v672
  %v675 = vadd.s32 %v667, %v673
  %vm676 = vcmp.ge.s32.totalorder %v330, %v674
  %vm677 = vcmp.ge.s32.totalorder %v331, %v675
  %v678 = vsel %vm676, 1, 0
  %v679 = vsel %vm677, 1, 0
  %v680 = vcvt.s32.f32 %v678
  %v681 = vcvt.s32.f32 %v679
  %682 = vadd.xlane.f32.xlu0 %v680
  %v683 = vpop.xlane.xlu0 %682
  %684 = vadd.xlane.f32.xlu0 %v681
  %v685 = vpop.xlane.xlu0 %684
  %v686 = vrot.slane %v683, 4
  %v687 = vadd.f32 %v683, %v686
  %v688 = vrot.slane %v687, 2
  %v689 = vadd.f32 %v687, %v688
  %v690 = vrot.slane %v689, 1
  %v691 = vadd.f32 %v689, %v690
  %v692 = vrot.slane %v685, 4
  %v693 = vadd.f32 %v685, %v692
  %v694 = vrot.slane %v693, 2
  %v695 = vadd.f32 %v693, %v694
  %v696 = vrot.slane %v695, 1
  %v697 = vadd.f32 %v695, %v696
  %vm698 = vcmp.ge.f32.partialorder %v691, %v334
  %vm699 = vcmp.ge.f32.partialorder %v697, %v335
  %v700 = vsel %vm698, %v674, %v666
  %v701 = vsel %vm699, %v675, %v667
  %v702 = vsel %vm698, %v668, %v674
  %v703 = vsel %vm699, %v669, %v675
  %v704 = vsub.s32 %v702, %v700
  %v705 = vsub.s32 %v703, %v701
  %v706 = vshra.s32 %v704, 1
  %v707 = vshra.s32 %v705, 1
  %v708 = vadd.s32 %v700, %v706
  %v709 = vadd.s32 %v701, %v707
  %vm710 = vcmp.ge.s32.totalorder %v330, %v708
  %vm711 = vcmp.ge.s32.totalorder %v331, %v709
  %v712 = vsel %vm710, 1, 0
  %v713 = vsel %vm711, 1, 0
  %v714 = vcvt.s32.f32 %v712
  %v715 = vcvt.s32.f32 %v713
  %716 = vadd.xlane.f32.xlu0 %v714
  %v717 = vpop.xlane.xlu0 %716
  %718 = vadd.xlane.f32.xlu0 %v715
  %v719 = vpop.xlane.xlu0 %718
  %v720 = vrot.slane %v717, 4
  %v721 = vadd.f32 %v717, %v720
  %v722 = vrot.slane %v721, 2
  %v723 = vadd.f32 %v721, %v722
  %v724 = vrot.slane %v723, 1
  %v725 = vadd.f32 %v723, %v724
  %v726 = vrot.slane %v719, 4
  %v727 = vadd.f32 %v719, %v726
  %v728 = vrot.slane %v727, 2
  %v729 = vadd.f32 %v727, %v728
  %v730 = vrot.slane %v729, 1
  %v731 = vadd.f32 %v729, %v730
  %vm732 = vcmp.ge.f32.partialorder %v725, %v334
  %vm733 = vcmp.ge.f32.partialorder %v731, %v335
  %v734 = vsel %vm732, %v708, %v700
  %v735 = vsel %vm733, %v709, %v701
  %v736 = vsel %vm732, %v702, %v708
  %v737 = vsel %vm733, %v703, %v709
  %v738 = vsub.s32 %v736, %v734
  %v739 = vsub.s32 %v737, %v735
  %v740 = vshra.s32 %v738, 1
  %v741 = vshra.s32 %v739, 1
  %v742 = vadd.s32 %v734, %v740
  %v743 = vadd.s32 %v735, %v741
  %vm744 = vcmp.ge.s32.totalorder %v330, %v742
  %vm745 = vcmp.ge.s32.totalorder %v331, %v743
  %v746 = vsel %vm744, 1, 0
  %v747 = vsel %vm745, 1, 0
  %v748 = vcvt.s32.f32 %v746
  %v749 = vcvt.s32.f32 %v747
  %750 = vadd.xlane.f32.xlu0 %v748
  %v751 = vpop.xlane.xlu0 %750
  %752 = vadd.xlane.f32.xlu0 %v749
  %v753 = vpop.xlane.xlu0 %752
  %v754 = vrot.slane %v751, 4
  %v755 = vadd.f32 %v751, %v754
  %v756 = vrot.slane %v755, 2
  %v757 = vadd.f32 %v755, %v756
  %v758 = vrot.slane %v757, 1
  %v759 = vadd.f32 %v757, %v758
  %v760 = vrot.slane %v753, 4
  %v761 = vadd.f32 %v753, %v760
  %v762 = vrot.slane %v761, 2
  %v763 = vadd.f32 %v761, %v762
  %v764 = vrot.slane %v763, 1
  %v765 = vadd.f32 %v763, %v764
  %vm766 = vcmp.ge.f32.partialorder %v759, %v334
  %vm767 = vcmp.ge.f32.partialorder %v765, %v335
  %v768 = vsel %vm766, %v742, %v734
  %v769 = vsel %vm767, %v743, %v735
  %v770 = vsel %vm766, %v736, %v742
  %v771 = vsel %vm767, %v737, %v743
  %v772 = vsub.s32 %v770, %v768
  %v773 = vsub.s32 %v771, %v769
  %v774 = vshra.s32 %v772, 1
  %v775 = vshra.s32 %v773, 1
  %v776 = vadd.s32 %v768, %v774
  %v777 = vadd.s32 %v769, %v775
  %vm778 = vcmp.ge.s32.totalorder %v330, %v776
  %vm779 = vcmp.ge.s32.totalorder %v331, %v777
  %v780 = vsel %vm778, 1, 0
  %v781 = vsel %vm779, 1, 0
  %v782 = vcvt.s32.f32 %v780
  %v783 = vcvt.s32.f32 %v781
  %784 = vadd.xlane.f32.xlu0 %v782
  %v785 = vpop.xlane.xlu0 %784
  %786 = vadd.xlane.f32.xlu0 %v783
  %v787 = vpop.xlane.xlu0 %786
  %v788 = vrot.slane %v785, 4
  %v789 = vadd.f32 %v785, %v788
  %v790 = vrot.slane %v789, 2
  %v791 = vadd.f32 %v789, %v790
  %v792 = vrot.slane %v791, 1
  %v793 = vadd.f32 %v791, %v792
  %v794 = vrot.slane %v787, 4
  %v795 = vadd.f32 %v787, %v794
  %v796 = vrot.slane %v795, 2
  %v797 = vadd.f32 %v795, %v796
  %v798 = vrot.slane %v797, 1
  %v799 = vadd.f32 %v797, %v798
  %vm800 = vcmp.ge.f32.partialorder %v793, %v334
  %vm801 = vcmp.ge.f32.partialorder %v799, %v335
  %v802 = vsel %vm800, %v776, %v768
  %v803 = vsel %vm801, %v777, %v769
  %v804 = vsel %vm800, %v770, %v776
  %v805 = vsel %vm801, %v771, %v777
  %v806 = vsub.s32 %v804, %v802
  %v807 = vsub.s32 %v805, %v803
  %v808 = vshra.s32 %v806, 1
  %v809 = vshra.s32 %v807, 1
  %v810 = vadd.s32 %v802, %v808
  %v811 = vadd.s32 %v803, %v809
  %vm812 = vcmp.ge.s32.totalorder %v330, %v810
  %vm813 = vcmp.ge.s32.totalorder %v331, %v811
  %v814 = vsel %vm812, 1, 0
  %v815 = vsel %vm813, 1, 0
  %v816 = vcvt.s32.f32 %v814
  %v817 = vcvt.s32.f32 %v815
  %818 = vadd.xlane.f32.xlu0 %v816
  %v819 = vpop.xlane.xlu0 %818
  %820 = vadd.xlane.f32.xlu0 %v817
  %v821 = vpop.xlane.xlu0 %820
  %v822 = vrot.slane %v819, 4
  %v823 = vadd.f32 %v819, %v822
  %v824 = vrot.slane %v823, 2
  %v825 = vadd.f32 %v823, %v824
  %v826 = vrot.slane %v825, 1
  %v827 = vadd.f32 %v825, %v826
  %v828 = vrot.slane %v821, 4
  %v829 = vadd.f32 %v821, %v828
  %v830 = vrot.slane %v829, 2
  %v831 = vadd.f32 %v829, %v830
  %v832 = vrot.slane %v831, 1
  %v833 = vadd.f32 %v831, %v832
  %vm834 = vcmp.ge.f32.partialorder %v827, %v334
  %vm835 = vcmp.ge.f32.partialorder %v833, %v335
  %v836 = vsel %vm834, %v810, %v802
  %v837 = vsel %vm835, %v811, %v803
  %v838 = vsel %vm834, %v804, %v810
  %v839 = vsel %vm835, %v805, %v811
  %v840 = vsub.s32 %v838, %v836
  %v841 = vsub.s32 %v839, %v837
  %v842 = vshra.s32 %v840, 1
  %v843 = vshra.s32 %v841, 1
  %v844 = vadd.s32 %v836, %v842
  %v845 = vadd.s32 %v837, %v843
  %vm846 = vcmp.ge.s32.totalorder %v330, %v844
  %vm847 = vcmp.ge.s32.totalorder %v331, %v845
  %v848 = vsel %vm846, 1, 0
  %v849 = vsel %vm847, 1, 0
  %v850 = vcvt.s32.f32 %v848
  %v851 = vcvt.s32.f32 %v849
  %852 = vadd.xlane.f32.xlu0 %v850
  %v853 = vpop.xlane.xlu0 %852
  %854 = vadd.xlane.f32.xlu0 %v851
  %v855 = vpop.xlane.xlu0 %854
  %v856 = vrot.slane %v853, 4
  %v857 = vadd.f32 %v853, %v856
  %v858 = vrot.slane %v857, 2
  %v859 = vadd.f32 %v857, %v858
  %v860 = vrot.slane %v859, 1
  %v861 = vadd.f32 %v859, %v860
  %v862 = vrot.slane %v855, 4
  %v863 = vadd.f32 %v855, %v862
  %v864 = vrot.slane %v863, 2
  %v865 = vadd.f32 %v863, %v864
  %v866 = vrot.slane %v865, 1
  %v867 = vadd.f32 %v865, %v866
  %vm868 = vcmp.ge.f32.partialorder %v861, %v334
  %vm869 = vcmp.ge.f32.partialorder %v867, %v335
  %v870 = vsel %vm868, %v844, %v836
  %v871 = vsel %vm869, %v845, %v837
  %v872 = vsel %vm868, %v838, %v844
  %v873 = vsel %vm869, %v839, %v845
  %v874 = vsub.s32 %v872, %v870
  %v875 = vsub.s32 %v873, %v871
  %v876 = vshra.s32 %v874, 1
  %v877 = vshra.s32 %v875, 1
  %v878 = vadd.s32 %v870, %v876
  %v879 = vadd.s32 %v871, %v877
  %vm880 = vcmp.ge.s32.totalorder %v330, %v878
  %vm881 = vcmp.ge.s32.totalorder %v331, %v879
  %v882 = vsel %vm880, 1, 0
  %v883 = vsel %vm881, 1, 0
  %v884 = vcvt.s32.f32 %v882
  %v885 = vcvt.s32.f32 %v883
  %886 = vadd.xlane.f32.xlu0 %v884
  %v887 = vpop.xlane.xlu0 %886
  %888 = vadd.xlane.f32.xlu0 %v885
  %v889 = vpop.xlane.xlu0 %888
  %v890 = vrot.slane %v887, 4
  %v891 = vadd.f32 %v887, %v890
  %v892 = vrot.slane %v891, 2
  %v893 = vadd.f32 %v891, %v892
  %v894 = vrot.slane %v893, 1
  %v895 = vadd.f32 %v893, %v894
  %v896 = vrot.slane %v889, 4
  %v897 = vadd.f32 %v889, %v896
  %v898 = vrot.slane %v897, 2
  %v899 = vadd.f32 %v897, %v898
  %v900 = vrot.slane %v899, 1
  %v901 = vadd.f32 %v899, %v900
  %vm902 = vcmp.ge.f32.partialorder %v895, %v334
  %vm903 = vcmp.ge.f32.partialorder %v901, %v335
  %v904 = vsel %vm902, %v878, %v870
  %v905 = vsel %vm903, %v879, %v871
  %v906 = vsel %vm902, %v872, %v878
  %v907 = vsel %vm903, %v873, %v879
  %v908 = vsub.s32 %v906, %v904
  %v909 = vsub.s32 %v907, %v905
  %v910 = vshra.s32 %v908, 1
  %v911 = vshra.s32 %v909, 1
  %v912 = vadd.s32 %v904, %v910
  %v913 = vadd.s32 %v905, %v911
  %vm914 = vcmp.ge.s32.totalorder %v330, %v912
  %vm915 = vcmp.ge.s32.totalorder %v331, %v913
  %v916 = vsel %vm914, 1, 0
  %v917 = vsel %vm915, 1, 0
  %v918 = vcvt.s32.f32 %v916
  %v919 = vcvt.s32.f32 %v917
  %920 = vadd.xlane.f32.xlu0 %v918
  %v921 = vpop.xlane.xlu0 %920
  %922 = vadd.xlane.f32.xlu0 %v919
  %v923 = vpop.xlane.xlu0 %922
  %v924 = vrot.slane %v921, 4
  %v925 = vadd.f32 %v921, %v924
  %v926 = vrot.slane %v925, 2
  %v927 = vadd.f32 %v925, %v926
  %v928 = vrot.slane %v927, 1
  %v929 = vadd.f32 %v927, %v928
  %v930 = vrot.slane %v923, 4
  %v931 = vadd.f32 %v923, %v930
  %v932 = vrot.slane %v931, 2
  %v933 = vadd.f32 %v931, %v932
  %v934 = vrot.slane %v933, 1
  %v935 = vadd.f32 %v933, %v934
  %vm936 = vcmp.ge.f32.partialorder %v929, %v334
  %vm937 = vcmp.ge.f32.partialorder %v935, %v335
  %v938 = vsel %vm936, %v912, %v904
  %v939 = vsel %vm937, %v913, %v905
  %v940 = vsel %vm936, %v906, %v912
  %v941 = vsel %vm937, %v907, %v913
  %v942 = vsub.s32 %v940, %v938
  %v943 = vsub.s32 %v941, %v939
  %v944 = vshra.s32 %v942, 1
  %v945 = vshra.s32 %v943, 1
  %v946 = vadd.s32 %v938, %v944
  %v947 = vadd.s32 %v939, %v945
  %vm948 = vcmp.ge.s32.totalorder %v330, %v946
  %vm949 = vcmp.ge.s32.totalorder %v331, %v947
  %v950 = vsel %vm948, 1, 0
  %v951 = vsel %vm949, 1, 0
  %v952 = vcvt.s32.f32 %v950
  %v953 = vcvt.s32.f32 %v951
  %954 = vadd.xlane.f32.xlu0 %v952
  %v955 = vpop.xlane.xlu0 %954
  %956 = vadd.xlane.f32.xlu0 %v953
  %v957 = vpop.xlane.xlu0 %956
  %v958 = vrot.slane %v955, 4
  %v959 = vadd.f32 %v955, %v958
  %v960 = vrot.slane %v959, 2
  %v961 = vadd.f32 %v959, %v960
  %v962 = vrot.slane %v961, 1
  %v963 = vadd.f32 %v961, %v962
  %v964 = vrot.slane %v957, 4
  %v965 = vadd.f32 %v957, %v964
  %v966 = vrot.slane %v965, 2
  %v967 = vadd.f32 %v965, %v966
  %v968 = vrot.slane %v967, 1
  %v969 = vadd.f32 %v967, %v968
  %vm970 = vcmp.ge.f32.partialorder %v963, %v334
  %vm971 = vcmp.ge.f32.partialorder %v969, %v335
  %v972 = vsel %vm970, %v946, %v938
  %v973 = vsel %vm971, %v947, %v939
  %v974 = vsel %vm970, %v940, %v946
  %v975 = vsel %vm971, %v941, %v947
  %v976 = vsub.s32 %v974, %v972
  %v977 = vsub.s32 %v975, %v973
  %v978 = vshra.s32 %v976, 1
  %v979 = vshra.s32 %v977, 1
  %v980 = vadd.s32 %v972, %v978
  %v981 = vadd.s32 %v973, %v979
  %vm982 = vcmp.ge.s32.totalorder %v330, %v980
  %vm983 = vcmp.ge.s32.totalorder %v331, %v981
  %v984 = vsel %vm982, 1, 0
  %v985 = vsel %vm983, 1, 0
  %v986 = vcvt.s32.f32 %v984
  %v987 = vcvt.s32.f32 %v985
  %988 = vadd.xlane.f32.xlu0 %v986
  %v989 = vpop.xlane.xlu0 %988
  %990 = vadd.xlane.f32.xlu0 %v987
  %v991 = vpop.xlane.xlu0 %990
  %v992 = vrot.slane %v989, 4
  %v993 = vadd.f32 %v989, %v992
  %v994 = vrot.slane %v993, 2
  %v995 = vadd.f32 %v993, %v994
  %v996 = vrot.slane %v995, 1
  %v997 = vadd.f32 %v995, %v996
  %v998 = vrot.slane %v991, 4
  %v999 = vadd.f32 %v991, %v998
  %v1000 = vrot.slane %v999, 2
  %v1001 = vadd.f32 %v999, %v1000
  %v1002 = vrot.slane %v1001, 1
  %v1003 = vadd.f32 %v1001, %v1002
  %vm1004 = vcmp.ge.f32.partialorder %v997, %v334
  %vm1005 = vcmp.ge.f32.partialorder %v1003, %v335
  %v1006 = vsel %vm1004, %v980, %v972
  %v1007 = vsel %vm1005, %v981, %v973
  %v1008 = vsel %vm1004, %v974, %v980
  %v1009 = vsel %vm1005, %v975, %v981
  %v1010 = vsub.s32 %v1008, %v1006
  %v1011 = vsub.s32 %v1009, %v1007
  %v1012 = vshra.s32 %v1010, 1
  %v1013 = vshra.s32 %v1011, 1
  %v1014 = vadd.s32 %v1006, %v1012
  %v1015 = vadd.s32 %v1007, %v1013
  %vm1016 = vcmp.ge.s32.totalorder %v330, %v1014
  %vm1017 = vcmp.ge.s32.totalorder %v331, %v1015
  %v1018 = vsel %vm1016, 1, 0
  %v1019 = vsel %vm1017, 1, 0
  %v1020 = vcvt.s32.f32 %v1018
  %v1021 = vcvt.s32.f32 %v1019
  %1022 = vadd.xlane.f32.xlu0 %v1020
  %v1023 = vpop.xlane.xlu0 %1022
  %1024 = vadd.xlane.f32.xlu0 %v1021
  %v1025 = vpop.xlane.xlu0 %1024
  %v1026 = vrot.slane %v1023, 4
  %v1027 = vadd.f32 %v1023, %v1026
  %v1028 = vrot.slane %v1027, 2
  %v1029 = vadd.f32 %v1027, %v1028
  %v1030 = vrot.slane %v1029, 1
  %v1031 = vadd.f32 %v1029, %v1030
  %v1032 = vrot.slane %v1025, 4
  %v1033 = vadd.f32 %v1025, %v1032
  %v1034 = vrot.slane %v1033, 2
  %v1035 = vadd.f32 %v1033, %v1034
  %v1036 = vrot.slane %v1035, 1
  %v1037 = vadd.f32 %v1035, %v1036
  %vm1038 = vcmp.ge.f32.partialorder %v1031, %v334
  %vm1039 = vcmp.ge.f32.partialorder %v1037, %v335
  %v1040 = vsel %vm1038, %v1014, %v1006
  %v1041 = vsel %vm1039, %v1015, %v1007
  %v1042 = vsel %vm1038, %v1008, %v1014
  %v1043 = vsel %vm1039, %v1009, %v1015
  %v1044 = vsub.s32 %v1042, %v1040
  %v1045 = vsub.s32 %v1043, %v1041
  %v1046 = vshra.s32 %v1044, 1
  %v1047 = vshra.s32 %v1045, 1
  %v1048 = vadd.s32 %v1040, %v1046
  %v1049 = vadd.s32 %v1041, %v1047
  %vm1050 = vcmp.ge.s32.totalorder %v330, %v1048
  %vm1051 = vcmp.ge.s32.totalorder %v331, %v1049
  %v1052 = vsel %vm1050, 1, 0
  %v1053 = vsel %vm1051, 1, 0
  %v1054 = vcvt.s32.f32 %v1052
  %v1055 = vcvt.s32.f32 %v1053
  %1056 = vadd.xlane.f32.xlu0 %v1054
  %v1057 = vpop.xlane.xlu0 %1056
  %1058 = vadd.xlane.f32.xlu0 %v1055
  %v1059 = vpop.xlane.xlu0 %1058
  %v1060 = vrot.slane %v1057, 4
  %v1061 = vadd.f32 %v1057, %v1060
  %v1062 = vrot.slane %v1061, 2
  %v1063 = vadd.f32 %v1061, %v1062
  %v1064 = vrot.slane %v1063, 1
  %v1065 = vadd.f32 %v1063, %v1064
  %v1066 = vrot.slane %v1059, 4
  %v1067 = vadd.f32 %v1059, %v1066
  %v1068 = vrot.slane %v1067, 2
  %v1069 = vadd.f32 %v1067, %v1068
  %v1070 = vrot.slane %v1069, 1
  %v1071 = vadd.f32 %v1069, %v1070
  %vm1072 = vcmp.ge.f32.partialorder %v1065, %v334
  %vm1073 = vcmp.ge.f32.partialorder %v1071, %v335
  %v1074 = vsel %vm1072, %v1048, %v1040
  %v1075 = vsel %vm1073, %v1049, %v1041
  %v1076 = vsel %vm1072, %v1042, %v1048
  %v1077 = vsel %vm1073, %v1043, %v1049
  %v1078 = vsub.s32 %v1076, %v1074
  %v1079 = vsub.s32 %v1077, %v1075
  %v1080 = vshra.s32 %v1078, 1
  %v1081 = vshra.s32 %v1079, 1
  %v1082 = vadd.s32 %v1074, %v1080
  %v1083 = vadd.s32 %v1075, %v1081
  %vm1084 = vcmp.ge.s32.totalorder %v330, %v1082
  %vm1085 = vcmp.ge.s32.totalorder %v331, %v1083
  %v1086 = vsel %vm1084, 1, 0
  %v1087 = vsel %vm1085, 1, 0
  %v1088 = vcvt.s32.f32 %v1086
  %v1089 = vcvt.s32.f32 %v1087
  %1090 = vadd.xlane.f32.xlu0 %v1088
  %v1091 = vpop.xlane.xlu0 %1090
  %1092 = vadd.xlane.f32.xlu0 %v1089
  %v1093 = vpop.xlane.xlu0 %1092
  %v1094 = vrot.slane %v1091, 4
  %v1095 = vadd.f32 %v1091, %v1094
  %v1096 = vrot.slane %v1095, 2
  %v1097 = vadd.f32 %v1095, %v1096
  %v1098 = vrot.slane %v1097, 1
  %v1099 = vadd.f32 %v1097, %v1098
  %v1100 = vrot.slane %v1093, 4
  %v1101 = vadd.f32 %v1093, %v1100
  %v1102 = vrot.slane %v1101, 2
  %v1103 = vadd.f32 %v1101, %v1102
  %v1104 = vrot.slane %v1103, 1
  %v1105 = vadd.f32 %v1103, %v1104
  %vm1106 = vcmp.ge.f32.partialorder %v1099, %v334
  %vm1107 = vcmp.ge.f32.partialorder %v1105, %v335
  %v1108 = vsel %vm1106, %v1082, %v1074
  %v1109 = vsel %vm1107, %v1083, %v1075
  %v1110 = vsel %vm1106, %v1076, %v1082
  %v1111 = vsel %vm1107, %v1077, %v1083
  %v1112 = vsub.s32 %v1110, %v1108
  %v1113 = vsub.s32 %v1111, %v1109
  %v1114 = vshra.s32 %v1112, 1
  %v1115 = vshra.s32 %v1113, 1
  %v1116 = vadd.s32 %v1108, %v1114
  %v1117 = vadd.s32 %v1109, %v1115
  %vm1118 = vcmp.ge.s32.totalorder %v330, %v1116
  %vm1119 = vcmp.ge.s32.totalorder %v331, %v1117
  %v1120 = vsel %vm1118, 1, 0
  %v1121 = vsel %vm1119, 1, 0
  %v1122 = vcvt.s32.f32 %v1120
  %v1123 = vcvt.s32.f32 %v1121
  %1124 = vadd.xlane.f32.xlu0 %v1122
  %v1125 = vpop.xlane.xlu0 %1124
  %1126 = vadd.xlane.f32.xlu0 %v1123
  %v1127 = vpop.xlane.xlu0 %1126
  %v1128 = vrot.slane %v1125, 4
  %v1129 = vadd.f32 %v1125, %v1128
  %v1130 = vrot.slane %v1129, 2
  %v1131 = vadd.f32 %v1129, %v1130
  %v1132 = vrot.slane %v1131, 1
  %v1133 = vadd.f32 %v1131, %v1132
  %v1134 = vrot.slane %v1127, 4
  %v1135 = vadd.f32 %v1127, %v1134
  %v1136 = vrot.slane %v1135, 2
  %v1137 = vadd.f32 %v1135, %v1136
  %v1138 = vrot.slane %v1137, 1
  %v1139 = vadd.f32 %v1137, %v1138
  %vm1140 = vcmp.ge.f32.partialorder %v1133, %v334
  %vm1141 = vcmp.ge.f32.partialorder %v1139, %v335
  %v1142 = vsel %vm1140, %v1116, %v1108
  %v1143 = vsel %vm1141, %v1117, %v1109
  %v1144 = vsel %vm1140, %v1110, %v1116
  %v1145 = vsel %vm1141, %v1111, %v1117
  %v1146 = vsub.s32 %v1144, %v1142
  %v1147 = vsub.s32 %v1145, %v1143
  %v1148 = vshra.s32 %v1146, 1
  %v1149 = vshra.s32 %v1147, 1
  %v1150 = vadd.s32 %v1142, %v1148
  %v1151 = vadd.s32 %v1143, %v1149
  %vm1152 = vcmp.ge.s32.totalorder %v330, %v1150
  %vm1153 = vcmp.ge.s32.totalorder %v331, %v1151
  %v1154 = vsel %vm1152, 1, 0
  %v1155 = vsel %vm1153, 1, 0
  %v1156 = vcvt.s32.f32 %v1154
  %v1157 = vcvt.s32.f32 %v1155
  %1158 = vadd.xlane.f32.xlu0 %v1156
  %v1159 = vpop.xlane.xlu0 %1158
  %1160 = vadd.xlane.f32.xlu0 %v1157
  %v1161 = vpop.xlane.xlu0 %1160
  %v1162 = vrot.slane %v1159, 4
  %v1163 = vadd.f32 %v1159, %v1162
  %v1164 = vrot.slane %v1163, 2
  %v1165 = vadd.f32 %v1163, %v1164
  %v1166 = vrot.slane %v1165, 1
  %v1167 = vadd.f32 %v1165, %v1166
  %v1168 = vrot.slane %v1161, 4
  %v1169 = vadd.f32 %v1161, %v1168
  %v1170 = vrot.slane %v1169, 2
  %v1171 = vadd.f32 %v1169, %v1170
  %v1172 = vrot.slane %v1171, 1
  %v1173 = vadd.f32 %v1171, %v1172
  %vm1174 = vcmp.ge.f32.partialorder %v1167, %v334
  %vm1175 = vcmp.ge.f32.partialorder %v1173, %v335
  %v1176 = vsel %vm1174, %v1150, %v1142
  %v1177 = vsel %vm1175, %v1151, %v1143
  %v1178 = vsel %vm1174, %v1144, %v1150
  %v1179 = vsel %vm1175, %v1145, %v1151
  %v1180 = vsub.s32 %v1178, %v1176
  %v1181 = vsub.s32 %v1179, %v1177
  %v1182 = vshra.s32 %v1180, 1
  %v1183 = vshra.s32 %v1181, 1
  %v1184 = vadd.s32 %v1176, %v1182
  %v1185 = vadd.s32 %v1177, %v1183
  %vm1186 = vcmp.ge.s32.totalorder %v330, %v1184
  %vm1187 = vcmp.ge.s32.totalorder %v331, %v1185
  %v1188 = vsel %vm1186, 1, 0
  %v1189 = vsel %vm1187, 1, 0
  %v1190 = vcvt.s32.f32 %v1188
  %v1191 = vcvt.s32.f32 %v1189
  %1192 = vadd.xlane.f32.xlu0 %v1190
  %v1193 = vpop.xlane.xlu0 %1192
  %1194 = vadd.xlane.f32.xlu0 %v1191
  %v1195 = vpop.xlane.xlu0 %1194
  %v1196 = vrot.slane %v1193, 4
  %v1197 = vadd.f32 %v1193, %v1196
  %v1198 = vrot.slane %v1197, 2
  %v1199 = vadd.f32 %v1197, %v1198
  %v1200 = vrot.slane %v1199, 1
  %v1201 = vadd.f32 %v1199, %v1200
  %v1202 = vrot.slane %v1195, 4
  %v1203 = vadd.f32 %v1195, %v1202
  %v1204 = vrot.slane %v1203, 2
  %v1205 = vadd.f32 %v1203, %v1204
  %v1206 = vrot.slane %v1205, 1
  %v1207 = vadd.f32 %v1205, %v1206
  %vm1208 = vcmp.ge.f32.partialorder %v1201, %v334
  %vm1209 = vcmp.ge.f32.partialorder %v1207, %v335
  %v1210 = vsel %vm1208, %v1184, %v1176
  %v1211 = vsel %vm1209, %v1185, %v1177
  %v1212 = vsel %vm1208, %v1178, %v1184
  %v1213 = vsel %vm1209, %v1179, %v1185
  %v1214 = vsub.s32 %v1212, %v1210
  %v1215 = vsub.s32 %v1213, %v1211
  %v1216 = vshra.s32 %v1214, 1
  %v1217 = vshra.s32 %v1215, 1
  %v1218 = vadd.s32 %v1210, %v1216
  %v1219 = vadd.s32 %v1211, %v1217
  %vm1220 = vcmp.ge.s32.totalorder %v330, %v1218
  %vm1221 = vcmp.ge.s32.totalorder %v331, %v1219
  %v1222 = vsel %vm1220, 1, 0
  %v1223 = vsel %vm1221, 1, 0
  %v1224 = vcvt.s32.f32 %v1222
  %v1225 = vcvt.s32.f32 %v1223
  %1226 = vadd.xlane.f32.xlu0 %v1224
  %v1227 = vpop.xlane.xlu0 %1226
  %1228 = vadd.xlane.f32.xlu0 %v1225
  %v1229 = vpop.xlane.xlu0 %1228
  %v1230 = vrot.slane %v1227, 4
  %v1231 = vadd.f32 %v1227, %v1230
  %v1232 = vrot.slane %v1231, 2
  %v1233 = vadd.f32 %v1231, %v1232
  %v1234 = vrot.slane %v1233, 1
  %v1235 = vadd.f32 %v1233, %v1234
  %v1236 = vrot.slane %v1229, 4
  %v1237 = vadd.f32 %v1229, %v1236
  %v1238 = vrot.slane %v1237, 2
  %v1239 = vadd.f32 %v1237, %v1238
  %v1240 = vrot.slane %v1239, 1
  %v1241 = vadd.f32 %v1239, %v1240
  %vm1242 = vcmp.ge.f32.partialorder %v1235, %v334
  %vm1243 = vcmp.ge.f32.partialorder %v1241, %v335
  %v1244 = vsel %vm1242, %v1218, %v1210
  %v1245 = vsel %vm1243, %v1219, %v1211
  %v1246 = vsel %vm1242, %v1212, %v1218
  %v1247 = vsel %vm1243, %v1213, %v1219
  %v1248 = vsub.s32 %v1246, %v1244
  %v1249 = vsub.s32 %v1247, %v1245
  %v1250 = vshra.s32 %v1248, 1
  %v1251 = vshra.s32 %v1249, 1
  %v1252 = vadd.s32 %v1244, %v1250
  %v1253 = vadd.s32 %v1245, %v1251
  %vm1254 = vcmp.ge.s32.totalorder %v330, %v1252
  %vm1255 = vcmp.ge.s32.totalorder %v331, %v1253
  %v1256 = vsel %vm1254, 1, 0
  %v1257 = vsel %vm1255, 1, 0
  %v1258 = vcvt.s32.f32 %v1256
  %v1259 = vcvt.s32.f32 %v1257
  %1260 = vadd.xlane.f32.xlu0 %v1258
  %v1261 = vpop.xlane.xlu0 %1260
  %1262 = vadd.xlane.f32.xlu0 %v1259
  %v1263 = vpop.xlane.xlu0 %1262
  %v1264 = vrot.slane %v1261, 4
  %v1265 = vadd.f32 %v1261, %v1264
  %v1266 = vrot.slane %v1265, 2
  %v1267 = vadd.f32 %v1265, %v1266
  %v1268 = vrot.slane %v1267, 1
  %v1269 = vadd.f32 %v1267, %v1268
  %v1270 = vrot.slane %v1263, 4
  %v1271 = vadd.f32 %v1263, %v1270
  %v1272 = vrot.slane %v1271, 2
  %v1273 = vadd.f32 %v1271, %v1272
  %v1274 = vrot.slane %v1273, 1
  %v1275 = vadd.f32 %v1273, %v1274
  %vm1276 = vcmp.ge.f32.partialorder %v1269, %v334
  %vm1277 = vcmp.ge.f32.partialorder %v1275, %v335
  %v1278 = vsel %vm1276, %v1252, %v1244
  %v1279 = vsel %vm1277, %v1253, %v1245
  %v1280 = vsel %vm1276, %v1246, %v1252
  %v1281 = vsel %vm1277, %v1247, %v1253
  %v1282 = vsub.s32 %v1280, %v1278
  %v1283 = vsub.s32 %v1281, %v1279
  %v1284 = vshra.s32 %v1282, 1
  %v1285 = vshra.s32 %v1283, 1
  %v1286 = vadd.s32 %v1278, %v1284
  %v1287 = vadd.s32 %v1279, %v1285
  %vm1288 = vcmp.ge.s32.totalorder %v330, %v1286
  %vm1289 = vcmp.ge.s32.totalorder %v331, %v1287
  %v1290 = vsel %vm1288, 1, 0
  %v1291 = vsel %vm1289, 1, 0
  %v1292 = vcvt.s32.f32 %v1290
  %v1293 = vcvt.s32.f32 %v1291
  %1294 = vadd.xlane.f32.xlu0 %v1292
  %v1295 = vpop.xlane.xlu0 %1294
  %1296 = vadd.xlane.f32.xlu0 %v1293
  %v1297 = vpop.xlane.xlu0 %1296
  %v1298 = vrot.slane %v1295, 4
  %v1299 = vadd.f32 %v1295, %v1298
  %v1300 = vrot.slane %v1299, 2
  %v1301 = vadd.f32 %v1299, %v1300
  %v1302 = vrot.slane %v1301, 1
  %v1303 = vadd.f32 %v1301, %v1302
  %v1304 = vrot.slane %v1297, 4
  %v1305 = vadd.f32 %v1297, %v1304
  %v1306 = vrot.slane %v1305, 2
  %v1307 = vadd.f32 %v1305, %v1306
  %v1308 = vrot.slane %v1307, 1
  %v1309 = vadd.f32 %v1307, %v1308
  %vm1310 = vcmp.ge.f32.partialorder %v1303, %v334
  %vm1311 = vcmp.ge.f32.partialorder %v1309, %v335
  %v1312 = vsel %vm1310, %v1286, %v1278
  %v1313 = vsel %vm1311, %v1287, %v1279
  %v1314 = vsel %vm1310, %v1280, %v1286
  %v1315 = vsel %vm1311, %v1281, %v1287
  %v1316 = vsub.s32 %v1314, %v1312
  %v1317 = vsub.s32 %v1315, %v1313
  %v1318 = vshra.s32 %v1316, 1
  %v1319 = vshra.s32 %v1317, 1
  %v1320 = vadd.s32 %v1312, %v1318
  %v1321 = vadd.s32 %v1313, %v1319
  %vm1322 = vcmp.ge.s32.totalorder %v330, %v1320
  %vm1323 = vcmp.ge.s32.totalorder %v331, %v1321
  %v1324 = vsel %vm1322, 1, 0
  %v1325 = vsel %vm1323, 1, 0
  %v1326 = vcvt.s32.f32 %v1324
  %v1327 = vcvt.s32.f32 %v1325
  %1328 = vadd.xlane.f32.xlu0 %v1326
  %v1329 = vpop.xlane.xlu0 %1328
  %1330 = vadd.xlane.f32.xlu0 %v1327
  %v1331 = vpop.xlane.xlu0 %1330
  %v1332 = vrot.slane %v1329, 4
  %v1333 = vadd.f32 %v1329, %v1332
  %v1334 = vrot.slane %v1333, 2
  %v1335 = vadd.f32 %v1333, %v1334
  %v1336 = vrot.slane %v1335, 1
  %v1337 = vadd.f32 %v1335, %v1336
  %v1338 = vrot.slane %v1331, 4
  %v1339 = vadd.f32 %v1331, %v1338
  %v1340 = vrot.slane %v1339, 2
  %v1341 = vadd.f32 %v1339, %v1340
  %v1342 = vrot.slane %v1341, 1
  %v1343 = vadd.f32 %v1341, %v1342
  %vm1344 = vcmp.ge.f32.partialorder %v1337, %v334
  %vm1345 = vcmp.ge.f32.partialorder %v1343, %v335
  %v1346 = vsel %vm1344, %v1320, %v1312
  %v1347 = vsel %vm1345, %v1321, %v1313
  %v1348 = vsel %vm1344, %v1314, %v1320
  %v1349 = vsel %vm1345, %v1315, %v1321
  %v1350 = vsub.s32 %v1348, %v1346
  %v1351 = vsub.s32 %v1349, %v1347
  %v1352 = vshra.s32 %v1350, 1
  %v1353 = vshra.s32 %v1351, 1
  %v1354 = vadd.s32 %v1346, %v1352
  %v1355 = vadd.s32 %v1347, %v1353
  %vm1356 = vcmp.ge.s32.totalorder %v330, %v1354
  %vm1357 = vcmp.ge.s32.totalorder %v331, %v1355
  %v1358 = vsel %vm1356, 1, 0
  %v1359 = vsel %vm1357, 1, 0
  %v1360 = vcvt.s32.f32 %v1358
  %v1361 = vcvt.s32.f32 %v1359
  %1362 = vadd.xlane.f32.xlu0 %v1360
  %v1363 = vpop.xlane.xlu0 %1362
  %1364 = vadd.xlane.f32.xlu0 %v1361
  %v1365 = vpop.xlane.xlu0 %1364
  %v1366 = vrot.slane %v1363, 4
  %v1367 = vadd.f32 %v1363, %v1366
  %v1368 = vrot.slane %v1367, 2
  %v1369 = vadd.f32 %v1367, %v1368
  %v1370 = vrot.slane %v1369, 1
  %v1371 = vadd.f32 %v1369, %v1370
  %v1372 = vrot.slane %v1365, 4
  %v1373 = vadd.f32 %v1365, %v1372
  %v1374 = vrot.slane %v1373, 2
  %v1375 = vadd.f32 %v1373, %v1374
  %v1376 = vrot.slane %v1375, 1
  %v1377 = vadd.f32 %v1375, %v1376
  %vm1378 = vcmp.ge.f32.partialorder %v1371, %v334
  %vm1379 = vcmp.ge.f32.partialorder %v1377, %v335
  %v1380 = vsel %vm1378, %v1354, %v1346
  %v1381 = vsel %vm1379, %v1355, %v1347
  %vm1382 = vcmp.gt.s32.totalorder %v330, %v1380
  %vm1383 = vcmp.gt.s32.totalorder %v331, %v1381
  %v1384 = vsel %vm1382, 1, 0
  %v1385 = vsel %vm1383, 1, 0
  %v1386 = vcvt.s32.f32 %v1384
  %v1387 = vcvt.s32.f32 %v1385
  %1388 = vadd.xlane.f32.xlu0 %v1386
  %v1389 = vpop.xlane.xlu0 %1388
  %1390 = vadd.xlane.f32.xlu0 %v1387
  %v1391 = vpop.xlane.xlu0 %1390
  %v1392 = vrot.slane %v1389, 4
  %v1393 = vadd.f32 %v1389, %v1392
  %v1394 = vrot.slane %v1393, 2
  %v1395 = vadd.f32 %v1393, %v1394
  %v1396 = vrot.slane %v1395, 1
  %v1397 = vadd.f32 %v1395, %v1396
  %v1398 = vrot.slane %v1391, 4
  %v1399 = vadd.f32 %v1391, %v1398
  %v1400 = vrot.slane %v1399, 2
  %v1401 = vadd.f32 %v1399, %v1400
  %v1402 = vrot.slane %v1401, 1
  %v1403 = vadd.f32 %v1401, %v1402
  %v1404 = vmul.f32 %v330, %v1386
  %v1405 = vmul.f32 %v331, %v1387
  %1406 = vadd.xlane.f32.xlu0 %v1404
  %v1407 = vpop.xlane.xlu0 %1406
  %1408 = vadd.xlane.f32.xlu0 %v1405
  %v1409 = vpop.xlane.xlu0 %1408
  %v1410 = vrot.slane %v1407, 4
  %v1411 = vadd.f32 %v1407, %v1410
  %v1412 = vrot.slane %v1411, 2
  %v1413 = vadd.f32 %v1411, %v1412
  %v1414 = vrot.slane %v1413, 1
  %v1415 = vadd.f32 %v1413, %v1414
  %v1416 = vrot.slane %v1409, 4
  %v1417 = vadd.f32 %v1409, %v1416
  %v1418 = vrot.slane %v1417, 2
  %v1419 = vadd.f32 %v1417, %v1418
  %v1420 = vrot.slane %v1419, 1
  %v1421 = vadd.f32 %v1419, %v1420
  %v1424 = vsub.f32 %v334, %v1397
  %v1425 = vsub.f32 %v335, %v1403
  %v1426 = vmax.f32 %v1424, 0.0
  %v1427 = vmax.f32 %v1425, 0.0
  %v1428 = vmul.f32 %v1426, %v1380
  %v1429 = vmul.f32 %v1427, %v1381
  %v1430 = vadd.f32 %v1415, %v1428
  %v1431 = vadd.f32 %v1421, %v1429
  %vm1432 = vcmp.gt.f32.partialorder %v334, 0.0
  %vm1433 = vcmp.gt.f32.partialorder %v335, 0.0
  %v1434 = vsel %vm1432, %v1430, 0.0
  %v1435 = vsel %vm1433, %v1431, 0.0
  %v1436 = vlaneseq
  %v1437 = vand.u32 %v1436, 127
  %vm1438 = vcmp.eq.s32.totalorder %v1437, 0
  %vm1439 = vcmp.eq.s32.totalorder %v1437, 1
  %v1440 = vadd.f32 %v323, %v1434
  %v1441 = vadd.f32 %v329, %v1435
  %vm1442 = vcmp.eq.s32.totalorder %v1437, 2
  %v1443 = vsel %vm1442, %v34, 0.0
  %v1444 = vsel %vm1442, %v40, 0.0
  %v1445 = vsel %vm1439, %v1440, %v1443
  %v1446 = vsel %vm1439, %v1441, %v1444
  %v1447 = vsel %vm1438, %v138, %v1445
  %v1448 = vsel %vm1438, %v144, %v1446
  %1449 = vst [vmem:[%s4] sm:$0x1] %v1447
  %1450 = vst [vmem:[%s4 + $0x1] sm:$0x1] %v1448
  // Predicated region
  $region18: #{ssd_loss_neg_weights.1} parent=0 // pred_check
    _
  $region19: #{ssd_loss_neg_weights.1} parent=0 // pred_check_branch
    %1452 = sbr.rel (0) target = $region21
  $region20: #{ssd_loss_neg_weights.1} parent=0 // pred_region
    _
  $region21: #{ssd_loss_neg_weights.1} parent=0 // pred_fallthru
    _
  // Predicated region
  $region22: #{ssd_loss_neg_weights.1} parent=0 // pred_check
    _
  $region23: #{ssd_loss_neg_weights.1} parent=0 // pred_check_branch
    %1454 = sbr.rel (0) target = $region25
  $region24: #{ssd_loss_neg_weights.1} parent=0 // pred_region
    _
  $region25: #{ssd_loss_neg_weights.1} parent=0 // pred_fallthru
    _

</llo_original>
